<compile_context>
chip_gen: v7x
topology: tpu7x:2x2x1
jax: 0.10.0
libtpu: 0.0.40
codegen_flags: <defaults>
</compile_context>

<pallas_src>
import jax
import jax.numpy as jnp
import numpy as np
from jax.experimental import pallas as pl
from jax.experimental.pallas import tpu as pltpu


# ----------------------------------------------------------------------------
# Pallas kernel: fused bidirectional GRU over the whole sequence
# ----------------------------------------------------------------------------
def _bigru_encoder_kernel(
    emb_ref,      # (S, B, H) f32   embedded inputs, seq-major (VMEM-resident)
    lens_ref,     # (B, 1)    i32   valid lengths (pack_padded_sequence lengths)
    h0_ref,       # (2, B, H) f32   initial hidden [fwd, bwd]
    w_ih_f_ref,   # (3, H, H) bf16  forward  W_ih, gate order [r, z, n], (in, out)
    w_hh_f_ref,   # (3, H, H) bf16  forward  W_hh
    b_ih_f_ref,   # (3, 1, H) f32   forward  b_ih
    b_hh_f_ref,   # (3, 1, H) f32   forward  b_hh
    w_ih_b_ref,   # (3, H, H) bf16  backward W_ih
    w_hh_b_ref,   # (3, H, H) bf16  backward W_hh
    b_ih_b_ref,   # (3, 1, H) f32   backward b_ih
    b_hh_b_ref,   # (3, 1, H) f32   backward b_hh
    out_ref,      # (S, B, H) f32   output: fwd + bwd outputs (zeros past each length)
    hsum_ref,     # (B, H)    f32   output: final fwd hidden + final bwd hidden
    hf_scr,       # VMEM (B, H) f32 forward hidden carry
    hb_scr,       # VMEM (B, H) f32 backward hidden carry
):
    t = pl.program_id(0)
    S = pl.num_programs(0)
    tb = S - 1 - t

    @pl.when(t == 0)
    def _init():
        out_ref[...] = jnp.zeros_like(out_ref)
        hf_scr[...] = h0_ref[0]
        hb_scr[...] = h0_ref[1]

    lens = lens_ref[...]                                   # (B, 1) int32

    def gru_cell(x, h, w_ih_ref, w_hh_ref, b_ih_ref, b_hh_ref):
        # PyTorch GRU cell, gate order [r, z, n]; bf16 MXU dots, f32 accumulation.
        def dot(a, w_ref, g):
            w = w_ref[g]                                   # (H, H) bf16
            return jnp.dot(a.astype(w.dtype), w, preferred_element_type=jnp.float32)

        gi_r = dot(x, w_ih_ref, 0) + b_ih_ref[0]
        gi_z = dot(x, w_ih_ref, 1) + b_ih_ref[1]
        gi_n = dot(x, w_ih_ref, 2) + b_ih_ref[2]
        gh_r = dot(h, w_hh_ref, 0) + b_hh_ref[0]
        gh_z = dot(h, w_hh_ref, 1) + b_hh_ref[1]
        gh_n = dot(h, w_hh_ref, 2) + b_hh_ref[2]
        r = jax.nn.sigmoid(gi_r + gh_r)
        z = jax.nn.sigmoid(gi_z + gh_z)
        n = jnp.tanh(gi_n + r * gh_n)
        return (1.0 - z) * n + z * h

    # ---- forward direction: time step t ----
    xf = emb_ref[t]                                        # (B, H)
    hf = hf_scr[...]
    cand_f = gru_cell(xf, hf, w_ih_f_ref, w_hh_f_ref, b_ih_f_ref, b_hh_f_ref)
    valid_f = lens > t                                     # (B, 1) bool
    hf_scr[...] = jnp.where(valid_f, cand_f, hf)           # hold final state past length
    out_ref[t] = out_ref[t] + jnp.where(valid_f, cand_f, 0.0)

    # ---- backward direction: time step S-1-t (starts fresh at each seq's last token) ----
    xb = emb_ref[tb]
    hb = hb_scr[...]
    cand_b = gru_cell(xb, hb, w_ih_b_ref, w_hh_b_ref, b_ih_b_ref, b_hh_b_ref)
    valid_b = lens > tb
    hb_scr[...] = jnp.where(valid_b, cand_b, hb)
    out_ref[tb] = out_ref[tb] + jnp.where(valid_b, cand_b, 0.0)

    @pl.when(t == S - 1)
    def _finalize():
        # hidden[:n_layers] + hidden[n_layers:]
        hsum_ref[...] = hf_scr[...] + hb_scr[...]


# ----------------------------------------------------------------------------
# Wrapper: embedding gather (glue) + single fused kernel call
# ----------------------------------------------------------------------------
@jax.jit
def _encoder_forward_impl(params, input_seqs, input_lengths, hidden):
    B, S = input_seqs.shape
    H = params["w_ih_f"].shape[-1]

    # Gather directly into the seq-major (S, B, H) layout the kernel consumes and the
    # module returns; only the tiny (B, S) id matrix is transposed, never activations.
    embedded = jnp.take(params["embedding"], input_seqs.T, axis=0)       # (S, B, H)
    lens2d = input_lengths.reshape(B, 1).astype(jnp.int32)

    const3 = lambda t: (0, 0, 0)
    const2 = lambda t: (0, 0)
    w_spec = pl.BlockSpec((3, H, H), const3)
    b_spec = pl.BlockSpec((3, 1, H), const3)

    grid_spec = pltpu.PrefetchScalarGridSpec(
        num_scalar_prefetch=0,
        grid=(S,),
        in_specs=[
            pl.BlockSpec((S, B, H), const3),   # embedded   (resident, single DMA)
            pl.BlockSpec((B, 1), const2),      # lengths
            pl.BlockSpec((2, B, H), const3),   # initial hidden
            w_spec, w_spec, b_spec, b_spec,    # forward GRU params  (resident)
            w_spec, w_spec, b_spec, b_spec,    # backward GRU params (resident)
        ],
        out_specs=[
            pl.BlockSpec((S, B, H), const3),   # summed outputs (resident accumulator)
            pl.BlockSpec((B, H), const2),      # summed final hidden
        ],
        scratch_shapes=[
            pltpu.VMEM((B, H), jnp.float32),   # forward hidden carry
            pltpu.VMEM((B, H), jnp.float32),   # backward hidden carry
        ],
    )

    outputs, h_sum = pl.pallas_call(
        _bigru_encoder_kernel,
        out_shape=(
            jax.ShapeDtypeStruct((S, B, H), jnp.float32),
            jax.ShapeDtypeStruct((B, H), jnp.float32),
        ),
        grid_spec=grid_spec,
        compiler_params=pltpu.CompilerParams(
            dimension_semantics=("arbitrary",),   # time axis is a true recurrence
        ),
    )(
        embedded, lens2d, hidden,
        params["w_ih_f"], params["w_hh_f"], params["b_ih_f"], params["b_hh_f"],
        params["w_ih_b"], params["w_hh_b"], params["b_ih_b"], params["b_hh_b"],
    )
    return outputs, h_sum[None, :, :]


def encoder_forward(params, input_seqs, input_lengths, hidden=None):
    """Mirrors EncoderRNN.forward (n_layers=1, bidirectional, eval).

    Args:
      input_seqs: (B, S) int32 token ids, batch-first, zero-padded.
      input_lengths: (B,) int32 valid lengths (as given to pack_padded_sequence).
      hidden: optional (2, B, H) initial hidden [fwd, bwd]; defaults to zeros
              (EncoderRNN.initHidden).

    Returns:
      outputs: (S, B, H) f32 — forward + backward GRU outputs, zeros at padded steps.
      hidden:  (1, B, H) f32 — forward final hidden + backward final hidden.
    """
    if hidden is None:
        B = input_seqs.shape[0]
        H = params["w_ih_f"].shape[-1]
        hidden = jnp.zeros((2, B, H), jnp.float32)
    return _encoder_forward_impl(params, input_seqs, input_lengths, hidden)


# ----------------------------------------------------------------------------
# Deterministic parameter init (shapes from EncoderRNN.__init__, restructured)
# ----------------------------------------------------------------------------
def init_params(key, input_size, hidden_size, weights_dtype=jnp.bfloat16):
    """GRU weights stored gate-separated / pre-transposed: (3, H, H) per direction,
    gate order [r, z, n], layout (gate, in_features, out_features)
    (== torch weight_ih_l0[g*H:(g+1)*H, :].T).  Weights bf16, biases f32."""
    H, V = hidden_size, input_size
    ks = jax.random.split(key, 9)
    scale = 0.1

    def w(k, shape, dtype):
        return (scale * jax.random.normal(k, shape)).astype(dtype)

    return {
        "embedding": w(ks[0], (V, H), jnp.float32),   # nn.Embedding(V, H)
        "w_ih_f": w(ks[1], (3, H, H), weights_dtype),
        "w_hh_f": w(ks[2], (3, H, H), weights_dtype),
        "b_ih_f": w(ks[3], (3, 1, H), jnp.float32),
        "b_hh_f": w(ks[4], (3, 1, H), jnp.float32),
        "w_ih_b": w(ks[5], (3, H, H), weights_dtype),
        "w_hh_b": w(ks[6], (3, H, H), weights_dtype),
        "b_ih_b": w(ks[7], (3, 1, H), jnp.float32),
        "b_hh_b": w(ks[8], (3, 1, H), jnp.float32),
    }


# ----------------------------------------------------------------------------
# Pure-JAX reference (same math, no Pallas) for a correctness check
# ----------------------------------------------------------------------------
def reference_forward(params, input_seqs, input_lengths, hidden=None):
    B, S = input_seqs.shape
    H = params["w_ih_f"].shape[-1]
    emb = jnp.take(params["embedding"], input_seqs.T, axis=0)            # (S, B, H)
    if hidden is None:
        hidden = jnp.zeros((2, B, H), jnp.float32)
    lens = input_lengths.reshape(B, 1)

    def cell(x, h, w_ih, w_hh, b_ih, b_hh):
        def dot(a, w):
            return jnp.dot(a.astype(w.dtype), w, preferred_element_type=jnp.float32)
        r = jax.nn.sigmoid(dot(x, w_ih[0]) + b_ih[0] + dot(h, w_hh[0]) + b_hh[0])
        z = jax.nn.sigmoid(dot(x, w_ih[1]) + b_ih[1] + dot(h, w_hh[1]) + b_hh[1])
        n = jnp.tanh(dot(x, w_ih[2]) + b_ih[2] + r * (dot(h, w_hh[2]) + b_hh[2]))
        return (1.0 - z) * n + z * h

    out = jnp.zeros((S, B, H), jnp.float32)
    hf, hb = hidden[0], hidden[1]
    for t in range(S):                                   # forward direction
        cand = cell(emb[t], hf, params["w_ih_f"], params["w_hh_f"],
                    params["b_ih_f"], params["b_hh_f"])
        valid = lens > t
        hf = jnp.where(valid, cand, hf)
        out = out.at[t].add(jnp.where(valid, cand, 0.0))
    for t in range(S - 1, -1, -1):                       # backward direction (packed)
        cand = cell(emb[t], hb, params["w_ih_b"], params["w_hh_b"],
                    params["b_ih_b"], params["b_hh_b"])
        valid = lens > t
        hb = jnp.where(valid, cand, hb)
        out = out.at[t].add(jnp.where(valid, cand, 0.0))
    return out, (hf + hb)[None]


if __name__ == "__main__":
    # Small shapes consistent with the module: batch=2, seq=8, hidden=32, vocab=20.
    B, S, H, V = 2, 8, 32, 20

    root = jax.random.PRNGKey(0)
    k_params, k_ids = jax.random.split(root, 2)

    params = init_params(k_params, input_size=V, hidden_size=H)
    input_seqs = jax.random.randint(k_ids, (B, S), 0, V, dtype=jnp.int32)
    # pack_padded_sequence-style lengths (sorted descending); steps past each length
    # must produce zero outputs, like pad_packed_sequence.
    input_lengths = jnp.array([S, 5], dtype=jnp.int32)

    outputs, hidden_out = encoder_forward(params, input_seqs, input_lengths)
    jax.block_until_ready((outputs, hidden_out))

    # Sanity check against the pure-JAX reference (same bf16-weight math).
    ref_out, ref_h = reference_forward(params, input_seqs, input_lengths)
    np.testing.assert_allclose(np.asarray(outputs), np.asarray(ref_out), atol=2e-3, rtol=2e-3)
    np.testing.assert_allclose(np.asarray(hidden_out), np.asarray(ref_h), atol=2e-3, rtol=2e-3)

    assert outputs.shape == (S, B, H)
    assert hidden_out.shape == (1, B, H)
    # Padded positions of the length-5 sequence are exactly zero.
    assert np.allclose(np.asarray(outputs[5:, 1, :]), 0.0)

    print("KERNEL_OK")
</pallas_src>

<mosaic_0001>
module attributes {stable_mosaic.version = 11 : i64} {
  func.func @_bigru_encoder_kernel(%arg0: i32, %arg1: memref<8x2x32xf32, #tpu.memory_space<vmem>>, %arg2: memref<2x1xi32, #tpu.memory_space<vmem>>, %arg3: memref<2x2x32xf32, #tpu.memory_space<vmem>>, %arg4: memref<3x32x32xbf16, #tpu.memory_space<vmem>>, %arg5: memref<3x32x32xbf16, #tpu.memory_space<vmem>>, %arg6: memref<3x1x32xf32, #tpu.memory_space<vmem>>, %arg7: memref<3x1x32xf32, #tpu.memory_space<vmem>>, %arg8: memref<3x32x32xbf16, #tpu.memory_space<vmem>>, %arg9: memref<3x32x32xbf16, #tpu.memory_space<vmem>>, %arg10: memref<3x1x32xf32, #tpu.memory_space<vmem>>, %arg11: memref<3x1x32xf32, #tpu.memory_space<vmem>>, %arg12: memref<8x2x32xf32, #tpu.memory_space<vmem>>, %arg13: memref<2x32xf32, #tpu.memory_space<vmem>>, %arg14: memref<2x32xf32, #tpu.memory_space<vmem>>, %arg15: memref<2x32xf32, #tpu.memory_space<vmem>>) attributes {dimension_semantics = [#tpu.dimension_semantics<arbitrary>], iteration_bounds = array<i64: 8>, scalar_prefetch = 0 : i64, scratch_operands = 2 : i64, tpu.core_type = #tpu.core_type<tc>, window_params = [{pipeline_mode = #tpu.pipeline_mode<synchronous>, transform_indices = @transform_0, window_bounds = array<i64: 8, 2, 32>}, {pipeline_mode = #tpu.pipeline_mode<synchronous>, transform_indices = @transform_1, window_bounds = array<i64: 2, 1>}, {pipeline_mode = #tpu.pipeline_mode<synchronous>, transform_indices = @transform_2, window_bounds = array<i64: 2, 2, 32>}, {pipeline_mode = #tpu.pipeline_mode<synchronous>, transform_indices = @transform_3, window_bounds = array<i64: 3, 32, 32>}, {pipeline_mode = #tpu.pipeline_mode<synchronous>, transform_indices = @transform_4, window_bounds = array<i64: 3, 32, 32>}, {pipeline_mode = #tpu.pipeline_mode<synchronous>, transform_indices = @transform_5, window_bounds = array<i64: 3, 1, 32>}, {pipeline_mode = #tpu.pipeline_mode<synchronous>, transform_indices = @transform_6, window_bounds = array<i64: 3, 1, 32>}, {pipeline_mode = #tpu.pipeline_mode<synchronous>, transform_indices = @transform_7, window_bounds = array<i64: 3, 32, 32>}, {pipeline_mode = #tpu.pipeline_mode<synchronous>, transform_indices = @transform_8, window_bounds = array<i64: 3, 32, 32>}, {pipeline_mode = #tpu.pipeline_mode<synchronous>, transform_indices = @transform_9, window_bounds = array<i64: 3, 1, 32>}, {pipeline_mode = #tpu.pipeline_mode<synchronous>, transform_indices = @transform_10, window_bounds = array<i64: 3, 1, 32>}, {pipeline_mode = #tpu.pipeline_mode<synchronous>, transform_indices = @transform_11, window_bounds = array<i64: 8, 2, 32>}, {pipeline_mode = #tpu.pipeline_mode<synchronous>, transform_indices = @transform_12, window_bounds = array<i64: 2, 32>}]} {
    %c7_i32 = arith.constant 7 : i32
    %0 = arith.subi %c7_i32, %arg0 : i32
    %c0_i32 = arith.constant 0 : i32
    %1 = arith.cmpi eq, %arg0, %c0_i32 : i32
    %2 = arith.extui %1 : i1 to i32
    %c0_i32_0 = arith.constant 0 : i32
    %3 = arith.cmpi ne, %2, %c0_i32_0 : i32
    scf.if %3 {
      %cst_113 = arith.constant 0.000000e+00 : f32
      %188 = vector.broadcast %cst_113 : f32 to vector<8x2x32xf32>
      %c0_114 = arith.constant 0 : index
      %c0_115 = arith.constant 0 : index
      %c0_116 = arith.constant 0 : index
      %189 = vector.load %arg12[%c0_114, %c0_115, %c0_116] : memref<8x2x32xf32, #tpu.memory_space<vmem>>, vector<8x2x32xf32>
      tpu.vector_store %arg12[%c0_114, %c0_115, %c0_116], %188 {strides = array<i32>} : memref<8x2x32xf32, #tpu.memory_space<vmem>>, vector<8x2x32xf32>,
      %c0_117 = arith.constant 0 : index
      %c0_118 = arith.constant 0 : index
      %c0_119 = arith.constant 0 : index
      %190 = vector.load %arg3[%c0_117, %c0_118, %c0_119] : memref<2x2x32xf32, #tpu.memory_space<vmem>>, vector<1x2x32xf32>
      %191 = vector.shape_cast %190 : vector<1x2x32xf32> to vector<2x32xf32>
      %c0_120 = arith.constant 0 : index
      %c0_121 = arith.constant 0 : index
      %192 = vector.load %arg14[%c0_120, %c0_121] : memref<2x32xf32, #tpu.memory_space<vmem>>, vector<2x32xf32>
      tpu.vector_store %arg14[%c0_120, %c0_121], %191 {strides = array<i32>} : memref<2x32xf32, #tpu.memory_space<vmem>>, vector<2x32xf32>,
      %c1_122 = arith.constant 1 : index
      %c0_123 = arith.constant 0 : index
      %c0_124 = arith.constant 0 : index
      %193 = vector.load %arg3[%c1_122, %c0_123, %c0_124] : memref<2x2x32xf32, #tpu.memory_space<vmem>>, vector<1x2x32xf32>
      %194 = vector.shape_cast %193 : vector<1x2x32xf32> to vector<2x32xf32>
      %c0_125 = arith.constant 0 : index
      %c0_126 = arith.constant 0 : index
      %195 = vector.load %arg15[%c0_125, %c0_126] : memref<2x32xf32, #tpu.memory_space<vmem>>, vector<2x32xf32>
      tpu.vector_store %arg15[%c0_125, %c0_126], %194 {strides = array<i32>} : memref<2x32xf32, #tpu.memory_space<vmem>>, vector<2x32xf32>,
    } else {
    }
    %c0 = arith.constant 0 : index
    %c0_1 = arith.constant 0 : index
    %4 = vector.load %arg2[%c0, %c0_1] : memref<2x1xi32, #tpu.memory_space<vmem>>, vector<2x1xi32>
    %5 = arith.index_cast %arg0 : i32 to index
    %c0_2 = arith.constant 0 : index
    %c0_3 = arith.constant 0 : index
    %6 = vector.load %arg1[%5, %c0_2, %c0_3] : memref<8x2x32xf32, #tpu.memory_space<vmem>>, vector<1x2x32xf32>
    %7 = vector.shape_cast %6 : vector<1x2x32xf32> to vector<2x32xf32>
    %c0_4 = arith.constant 0 : index
    %c0_5 = arith.constant 0 : index
    %8 = vector.load %arg14[%c0_4, %c0_5] : memref<2x32xf32, #tpu.memory_space<vmem>>, vector<2x32xf32>
    %c0_6 = arith.constant 0 : index
    %c0_7 = arith.constant 0 : index
    %c0_8 = arith.constant 0 : index
    %9 = vector.load %arg4[%c0_6, %c0_7, %c0_8] : memref<3x32x32xbf16, #tpu.memory_space<vmem>>, vector<1x32x32xbf16>
    %10 = vector.shape_cast %9 : vector<1x32x32xbf16> to vector<32x32xbf16>
    %11 = arith.truncf %7 : vector<2x32xf32> to vector<2x32xbf16>
    %cst = arith.constant dense<0.000000e+00> : vector<2x32xf32>
    %12 = tpu.matmul %11, %10, %cst {dimension_numbers = #tpu.dot_dimension_numbers<[1], [0], [0], [1], [0, 0, 1, 1], [], []>} : vector<2x32xbf16>, vector<32x32xbf16>, vector<2x32xf32> -> vector<2x32xf32>
    %c0_9 = arith.constant 0 : index
    %c0_10 = arith.constant 0 : index
    %c0_11 = arith.constant 0 : index
    %13 = vector.load %arg6[%c0_9, %c0_10, %c0_11] : memref<3x1x32xf32, #tpu.memory_space<vmem>>, vector<1x1x32xf32>
    %14 = vector.shape_cast %13 : vector<1x1x32xf32> to vector<1x32xf32>
    %15 = vector.broadcast %14 : vector<1x32xf32> to vector<2x32xf32>
    %16 = arith.addf %12, %15 : vector<2x32xf32>
    %c1 = arith.constant 1 : index
    %c0_12 = arith.constant 0 : index
    %c0_13 = arith.constant 0 : index
    %17 = vector.load %arg4[%c1, %c0_12, %c0_13] : memref<3x32x32xbf16, #tpu.memory_space<vmem>>, vector<1x32x32xbf16>
    %18 = vector.shape_cast %17 : vector<1x32x32xbf16> to vector<32x32xbf16>
    %19 = arith.truncf %7 : vector<2x32xf32> to vector<2x32xbf16>
    %cst_14 = arith.constant dense<0.000000e+00> : vector<2x32xf32>
    %20 = tpu.matmul %19, %18, %cst_14 {dimension_numbers = #tpu.dot_dimension_numbers<[1], [0], [0], [1], [0, 0, 1, 1], [], []>} : vector<2x32xbf16>, vector<32x32xbf16>, vector<2x32xf32> -> vector<2x32xf32>
    %c1_15 = arith.constant 1 : index
    %c0_16 = arith.constant 0 : index
    %c0_17 = arith.constant 0 : index
    %21 = vector.load %arg6[%c1_15, %c0_16, %c0_17] : memref<3x1x32xf32, #tpu.memory_space<vmem>>, vector<1x1x32xf32>
    %22 = vector.shape_cast %21 : vector<1x1x32xf32> to vector<1x32xf32>
    %23 = vector.broadcast %22 : vector<1x32xf32> to vector<2x32xf32>
    %24 = arith.addf %20, %23 : vector<2x32xf32>
    %c2 = arith.constant 2 : index
    %c0_18 = arith.constant 0 : index
    %c0_19 = arith.constant 0 : index
    %25 = vector.load %arg4[%c2, %c0_18, %c0_19] : memref<3x32x32xbf16, #tpu.memory_space<vmem>>, vector<1x32x32xbf16>
    %26 = vector.shape_cast %25 : vector<1x32x32xbf16> to vector<32x32xbf16>
    %27 = arith.truncf %7 : vector<2x32xf32> to vector<2x32xbf16>
    %cst_20 = arith.constant dense<0.000000e+00> : vector<2x32xf32>
    %28 = tpu.matmul %27, %26, %cst_20 {dimension_numbers = #tpu.dot_dimension_numbers<[1], [0], [0], [1], [0, 0, 1, 1], [], []>} : vector<2x32xbf16>, vector<32x32xbf16>, vector<2x32xf32> -> vector<2x32xf32>
    %c2_21 = arith.constant 2 : index
    %c0_22 = arith.constant 0 : index
    %c0_23 = arith.constant 0 : index
    %29 = vector.load %arg6[%c2_21, %c0_22, %c0_23] : memref<3x1x32xf32, #tpu.memory_space<vmem>>, vector<1x1x32xf32>
    %30 = vector.shape_cast %29 : vector<1x1x32xf32> to vector<1x32xf32>
    %31 = vector.broadcast %30 : vector<1x32xf32> to vector<2x32xf32>
    %32 = arith.addf %28, %31 : vector<2x32xf32>
    %c0_24 = arith.constant 0 : index
    %c0_25 = arith.constant 0 : index
    %c0_26 = arith.constant 0 : index
    %33 = vector.load %arg5[%c0_24, %c0_25, %c0_26] : memref<3x32x32xbf16, #tpu.memory_space<vmem>>, vector<1x32x32xbf16>
    %34 = vector.shape_cast %33 : vector<1x32x32xbf16> to vector<32x32xbf16>
    %35 = arith.truncf %8 : vector<2x32xf32> to vector<2x32xbf16>
    %cst_27 = arith.constant dense<0.000000e+00> : vector<2x32xf32>
    %36 = tpu.matmul %35, %34, %cst_27 {dimension_numbers = #tpu.dot_dimension_numbers<[1], [0], [0], [1], [0, 0, 1, 1], [], []>} : vector<2x32xbf16>, vector<32x32xbf16>, vector<2x32xf32> -> vector<2x32xf32>
    %c0_28 = arith.constant 0 : index
    %c0_29 = arith.constant 0 : index
    %c0_30 = arith.constant 0 : index
    %37 = vector.load %arg7[%c0_28, %c0_29, %c0_30] : memref<3x1x32xf32, #tpu.memory_space<vmem>>, vector<1x1x32xf32>
    %38 = vector.shape_cast %37 : vector<1x1x32xf32> to vector<1x32xf32>
    %39 = vector.broadcast %38 : vector<1x32xf32> to vector<2x32xf32>
    %40 = arith.addf %36, %39 : vector<2x32xf32>
    %c1_31 = arith.constant 1 : index
    %c0_32 = arith.constant 0 : index
    %c0_33 = arith.constant 0 : index
    %41 = vector.load %arg5[%c1_31, %c0_32, %c0_33] : memref<3x32x32xbf16, #tpu.memory_space<vmem>>, vector<1x32x32xbf16>
    %42 = vector.shape_cast %41 : vector<1x32x32xbf16> to vector<32x32xbf16>
    %43 = arith.truncf %8 : vector<2x32xf32> to vector<2x32xbf16>
    %cst_34 = arith.constant dense<0.000000e+00> : vector<2x32xf32>
    %44 = tpu.matmul %43, %42, %cst_34 {dimension_numbers = #tpu.dot_dimension_numbers<[1], [0], [0], [1], [0, 0, 1, 1], [], []>} : vector<2x32xbf16>, vector<32x32xbf16>, vector<2x32xf32> -> vector<2x32xf32>
    %c1_35 = arith.constant 1 : index
    %c0_36 = arith.constant 0 : index
    %c0_37 = arith.constant 0 : index
    %45 = vector.load %arg7[%c1_35, %c0_36, %c0_37] : memref<3x1x32xf32, #tpu.memory_space<vmem>>, vector<1x1x32xf32>
    %46 = vector.shape_cast %45 : vector<1x1x32xf32> to vector<1x32xf32>
    %47 = vector.broadcast %46 : vector<1x32xf32> to vector<2x32xf32>
    %48 = arith.addf %44, %47 : vector<2x32xf32>
    %c2_38 = arith.constant 2 : index
    %c0_39 = arith.constant 0 : index
    %c0_40 = arith.constant 0 : index
    %49 = vector.load %arg5[%c2_38, %c0_39, %c0_40] : memref<3x32x32xbf16, #tpu.memory_space<vmem>>, vector<1x32x32xbf16>
    %50 = vector.shape_cast %49 : vector<1x32x32xbf16> to vector<32x32xbf16>
    %51 = arith.truncf %8 : vector<2x32xf32> to vector<2x32xbf16>
    %cst_41 = arith.constant dense<0.000000e+00> : vector<2x32xf32>
    %52 = tpu.matmul %51, %50, %cst_41 {dimension_numbers = #tpu.dot_dimension_numbers<[1], [0], [0], [1], [0, 0, 1, 1], [], []>} : vector<2x32xbf16>, vector<32x32xbf16>, vector<2x32xf32> -> vector<2x32xf32>
    %c2_42 = arith.constant 2 : index
    %c0_43 = arith.constant 0 : index
    %c0_44 = arith.constant 0 : index
    %53 = vector.load %arg7[%c2_42, %c0_43, %c0_44] : memref<3x1x32xf32, #tpu.memory_space<vmem>>, vector<1x1x32xf32>
    %54 = vector.shape_cast %53 : vector<1x1x32xf32> to vector<1x32xf32>
    %55 = vector.broadcast %54 : vector<1x32xf32> to vector<2x32xf32>
    %56 = arith.addf %52, %55 : vector<2x32xf32>
    %57 = arith.addf %16, %40 : vector<2x32xf32>
    %58 = arith.negf %57 : vector<2x32xf32>
    %59 = math.exp %58 : vector<2x32xf32>
    %cst_45 = arith.constant 1.000000e+00 : f32
    %60 = vector.broadcast %cst_45 : f32 to vector<2x32xf32>
    %61 = arith.addf %60, %59 : vector<2x32xf32>
    %62 = arith.divf %60, %61 : vector<2x32xf32>
    %63 = arith.addf %24, %48 : vector<2x32xf32>
    %64 = arith.negf %63 : vector<2x32xf32>
    %65 = math.exp %64 : vector<2x32xf32>
    %cst_46 = arith.constant 1.000000e+00 : f32
    %66 = vector.broadcast %cst_46 : f32 to vector<2x32xf32>
    %67 = arith.addf %66, %65 : vector<2x32xf32>
    %68 = arith.divf %66, %67 : vector<2x32xf32>
    %69 = arith.mulf %62, %56 : vector<2x32xf32>
    %70 = arith.addf %32, %69 : vector<2x32xf32>
    %71 = math.tanh %70 : vector<2x32xf32>
    %cst_47 = arith.constant 1.000000e+00 : f32
    %72 = vector.broadcast %cst_47 : f32 to vector<2x32xf32>
    %73 = arith.subf %72, %68 : vector<2x32xf32>
    %74 = arith.mulf %73, %71 : vector<2x32xf32>
    %75 = arith.mulf %68, %8 : vector<2x32xf32>
    %76 = arith.addf %74, %75 : vector<2x32xf32>
    %77 = vector.broadcast %arg0 : i32 to vector<2x1xi32>
    %78 = arith.cmpi sgt, %4, %77 : vector<2x1xi32>
    %79 = vector.shape_cast %78 : vector<2x1xi1> to vector<2x1xi1>
    %80 = vector.broadcast %79 : vector<2x1xi1> to vector<2x32xi1>
    %81 = arith.select %80, %76, %8 : vector<2x32xi1>, vector<2x32xf32>
    %c0_48 = arith.constant 0 : index
    %c0_49 = arith.constant 0 : index
    %82 = vector.load %arg14[%c0_48, %c0_49] : memref<2x32xf32, #tpu.memory_space<vmem>>, vector<2x32xf32>
    tpu.vector_store %arg14[%c0_48, %c0_49], %81 {strides = array<i32>} : memref<2x32xf32, #tpu.memory_space<vmem>>, vector<2x32xf32>,
    %83 = arith.index_cast %arg0 : i32 to index
    %c0_50 = arith.constant 0 : index
    %c0_51 = arith.constant 0 : index
    %84 = vector.load %arg12[%83, %c0_50, %c0_51] : memref<8x2x32xf32, #tpu.memory_space<vmem>>, vector<1x2x32xf32>
    %85 = vector.shape_cast %84 : vector<1x2x32xf32> to vector<2x32xf32>
    %cst_52 = arith.constant 0.000000e+00 : f32
    %86 = vector.shape_cast %78 : vector<2x1xi1> to vector<2x1xi1>
    %87 = vector.broadcast %86 : vector<2x1xi1> to vector<2x32xi1>
    %88 = vector.broadcast %cst_52 : f32 to vector<2x32xf32>
    %89 = arith.select %87, %76, %88 : vector<2x32xi1>, vector<2x32xf32>
    %90 = arith.addf %85, %89 : vector<2x32xf32>
    %91 = arith.index_cast %arg0 : i32 to index
    %c0_53 = arith.constant 0 : index
    %c0_54 = arith.constant 0 : index
    %92 = vector.load %arg12[%91, %c0_53, %c0_54] : memref<8x2x32xf32, #tpu.memory_space<vmem>>, vector<1x2x32xf32>
    %93 = vector.shape_cast %92 : vector<1x2x32xf32> to vector<2x32xf32>
    %94 = vector.shape_cast %90 : vector<2x32xf32> to vector<1x2x32xf32>
    tpu.vector_store %arg12[%91, %c0_53, %c0_54], %94 {strides = array<i32>} : memref<8x2x32xf32, #tpu.memory_space<vmem>>, vector<1x2x32xf32>,
    %95 = arith.index_cast %0 : i32 to index
    %c0_55 = arith.constant 0 : index
    %c0_56 = arith.constant 0 : index
    %96 = vector.load %arg1[%95, %c0_55, %c0_56] : memref<8x2x32xf32, #tpu.memory_space<vmem>>, vector<1x2x32xf32>
    %97 = vector.shape_cast %96 : vector<1x2x32xf32> to vector<2x32xf32>
    %c0_57 = arith.constant 0 : index
    %c0_58 = arith.constant 0 : index
    %98 = vector.load %arg15[%c0_57, %c0_58] : memref<2x32xf32, #tpu.memory_space<vmem>>, vector<2x32xf32>
    %c0_59 = arith.constant 0 : index
    %c0_60 = arith.constant 0 : index
    %c0_61 = arith.constant 0 : index
    %99 = vector.load %arg8[%c0_59, %c0_60, %c0_61] : memref<3x32x32xbf16, #tpu.memory_space<vmem>>, vector<1x32x32xbf16>
    %100 = vector.shape_cast %99 : vector<1x32x32xbf16> to vector<32x32xbf16>
    %101 = arith.truncf %97 : vector<2x32xf32> to vector<2x32xbf16>
    %cst_62 = arith.constant dense<0.000000e+00> : vector<2x32xf32>
    %102 = tpu.matmul %101, %100, %cst_62 {dimension_numbers = #tpu.dot_dimension_numbers<[1], [0], [0], [1], [0, 0, 1, 1], [], []>} : vector<2x32xbf16>, vector<32x32xbf16>, vector<2x32xf32> -> vector<2x32xf32>
    %c0_63 = arith.constant 0 : index
    %c0_64 = arith.constant 0 : index
    %c0_65 = arith.constant 0 : index
    %103 = vector.load %arg10[%c0_63, %c0_64, %c0_65] : memref<3x1x32xf32, #tpu.memory_space<vmem>>, vector<1x1x32xf32>
    %104 = vector.shape_cast %103 : vector<1x1x32xf32> to vector<1x32xf32>
    %105 = vector.broadcast %104 : vector<1x32xf32> to vector<2x32xf32>
    %106 = arith.addf %102, %105 : vector<2x32xf32>
    %c1_66 = arith.constant 1 : index
    %c0_67 = arith.constant 0 : index
    %c0_68 = arith.constant 0 : index
    %107 = vector.load %arg8[%c1_66, %c0_67, %c0_68] : memref<3x32x32xbf16, #tpu.memory_space<vmem>>, vector<1x32x32xbf16>
    %108 = vector.shape_cast %107 : vector<1x32x32xbf16> to vector<32x32xbf16>
    %109 = arith.truncf %97 : vector<2x32xf32> to vector<2x32xbf16>
    %cst_69 = arith.constant dense<0.000000e+00> : vector<2x32xf32>
    %110 = tpu.matmul %109, %108, %cst_69 {dimension_numbers = #tpu.dot_dimension_numbers<[1], [0], [0], [1], [0, 0, 1, 1], [], []>} : vector<2x32xbf16>, vector<32x32xbf16>, vector<2x32xf32> -> vector<2x32xf32>
    %c1_70 = arith.constant 1 : index
    %c0_71 = arith.constant 0 : index
    %c0_72 = arith.constant 0 : index
    %111 = vector.load %arg10[%c1_70, %c0_71, %c0_72] : memref<3x1x32xf32, #tpu.memory_space<vmem>>, vector<1x1x32xf32>
    %112 = vector.shape_cast %111 : vector<1x1x32xf32> to vector<1x32xf32>
    %113 = vector.broadcast %112 : vector<1x32xf32> to vector<2x32xf32>
    %114 = arith.addf %110, %113 : vector<2x32xf32>
    %c2_73 = arith.constant 2 : index
    %c0_74 = arith.constant 0 : index
    %c0_75 = arith.constant 0 : index
    %115 = vector.load %arg8[%c2_73, %c0_74, %c0_75] : memref<3x32x32xbf16, #tpu.memory_space<vmem>>, vector<1x32x32xbf16>
    %116 = vector.shape_cast %115 : vector<1x32x32xbf16> to vector<32x32xbf16>
    %117 = arith.truncf %97 : vector<2x32xf32> to vector<2x32xbf16>
    %cst_76 = arith.constant dense<0.000000e+00> : vector<2x32xf32>
    %118 = tpu.matmul %117, %116, %cst_76 {dimension_numbers = #tpu.dot_dimension_numbers<[1], [0], [0], [1], [0, 0, 1, 1], [], []>} : vector<2x32xbf16>, vector<32x32xbf16>, vector<2x32xf32> -> vector<2x32xf32>
    %c2_77 = arith.constant 2 : index
    %c0_78 = arith.constant 0 : index
    %c0_79 = arith.constant 0 : index
    %119 = vector.load %arg10[%c2_77, %c0_78, %c0_79] : memref<3x1x32xf32, #tpu.memory_space<vmem>>, vector<1x1x32xf32>
    %120 = vector.shape_cast %119 : vector<1x1x32xf32> to vector<1x32xf32>
    %121 = vector.broadcast %120 : vector<1x32xf32> to vector<2x32xf32>
    %122 = arith.addf %118, %121 : vector<2x32xf32>
    %c0_80 = arith.constant 0 : index
    %c0_81 = arith.constant 0 : index
    %c0_82 = arith.constant 0 : index
    %123 = vector.load %arg9[%c0_80, %c0_81, %c0_82] : memref<3x32x32xbf16, #tpu.memory_space<vmem>>, vector<1x32x32xbf16>
    %124 = vector.shape_cast %123 : vector<1x32x32xbf16> to vector<32x32xbf16>
    %125 = arith.truncf %98 : vector<2x32xf32> to vector<2x32xbf16>
    %cst_83 = arith.constant dense<0.000000e+00> : vector<2x32xf32>
    %126 = tpu.matmul %125, %124, %cst_83 {dimension_numbers = #tpu.dot_dimension_numbers<[1], [0], [0], [1], [0, 0, 1, 1], [], []>} : vector<2x32xbf16>, vector<32x32xbf16>, vector<2x32xf32> -> vector<2x32xf32>
    %c0_84 = arith.constant 0 : index
    %c0_85 = arith.constant 0 : index
    %c0_86 = arith.constant 0 : index
    %127 = vector.load %arg11[%c0_84, %c0_85, %c0_86] : memref<3x1x32xf32, #tpu.memory_space<vmem>>, vector<1x1x32xf32>
    %128 = vector.shape_cast %127 : vector<1x1x32xf32> to vector<1x32xf32>
    %129 = vector.broadcast %128 : vector<1x32xf32> to vector<2x32xf32>
    %130 = arith.addf %126, %129 : vector<2x32xf32>
    %c1_87 = arith.constant 1 : index
    %c0_88 = arith.constant 0 : index
    %c0_89 = arith.constant 0 : index
    %131 = vector.load %arg9[%c1_87, %c0_88, %c0_89] : memref<3x32x32xbf16, #tpu.memory_space<vmem>>, vector<1x32x32xbf16>
    %132 = vector.shape_cast %131 : vector<1x32x32xbf16> to vector<32x32xbf16>
    %133 = arith.truncf %98 : vector<2x32xf32> to vector<2x32xbf16>
    %cst_90 = arith.constant dense<0.000000e+00> : vector<2x32xf32>
    %134 = tpu.matmul %133, %132, %cst_90 {dimension_numbers = #tpu.dot_dimension_numbers<[1], [0], [0], [1], [0, 0, 1, 1], [], []>} : vector<2x32xbf16>, vector<32x32xbf16>, vector<2x32xf32> -> vector<2x32xf32>
    %c1_91 = arith.constant 1 : index
    %c0_92 = arith.constant 0 : index
    %c0_93 = arith.constant 0 : index
    %135 = vector.load %arg11[%c1_91, %c0_92, %c0_93] : memref<3x1x32xf32, #tpu.memory_space<vmem>>, vector<1x1x32xf32>
    %136 = vector.shape_cast %135 : vector<1x1x32xf32> to vector<1x32xf32>
    %137 = vector.broadcast %136 : vector<1x32xf32> to vector<2x32xf32>
    %138 = arith.addf %134, %137 : vector<2x32xf32>
    %c2_94 = arith.constant 2 : index
    %c0_95 = arith.constant 0 : index
    %c0_96 = arith.constant 0 : index
    %139 = vector.load %arg9[%c2_94, %c0_95, %c0_96] : memref<3x32x32xbf16, #tpu.memory_space<vmem>>, vector<1x32x32xbf16>
    %140 = vector.shape_cast %139 : vector<1x32x32xbf16> to vector<32x32xbf16>
    %141 = arith.truncf %98 : vector<2x32xf32> to vector<2x32xbf16>
    %cst_97 = arith.constant dense<0.000000e+00> : vector<2x32xf32>
    %142 = tpu.matmul %141, %140, %cst_97 {dimension_numbers = #tpu.dot_dimension_numbers<[1], [0], [0], [1], [0, 0, 1, 1], [], []>} : vector<2x32xbf16>, vector<32x32xbf16>, vector<2x32xf32> -> vector<2x32xf32>
    %c2_98 = arith.constant 2 : index
    %c0_99 = arith.constant 0 : index
    %c0_100 = arith.constant 0 : index
    %143 = vector.load %arg11[%c2_98, %c0_99, %c0_100] : memref<3x1x32xf32, #tpu.memory_space<vmem>>, vector<1x1x32xf32>
    %144 = vector.shape_cast %143 : vector<1x1x32xf32> to vector<1x32xf32>
    %145 = vector.broadcast %144 : vector<1x32xf32> to vector<2x32xf32>
    %146 = arith.addf %142, %145 : vector<2x32xf32>
    %147 = arith.addf %106, %130 : vector<2x32xf32>
    %148 = arith.negf %147 : vector<2x32xf32>
    %149 = math.exp %148 : vector<2x32xf32>
    %cst_101 = arith.constant 1.000000e+00 : f32
    %150 = vector.broadcast %cst_101 : f32 to vector<2x32xf32>
    %151 = arith.addf %150, %149 : vector<2x32xf32>
    %152 = arith.divf %150, %151 : vector<2x32xf32>
    %153 = arith.addf %114, %138 : vector<2x32xf32>
    %154 = arith.negf %153 : vector<2x32xf32>
    %155 = math.exp %154 : vector<2x32xf32>
    %cst_102 = arith.constant 1.000000e+00 : f32
    %156 = vector.broadcast %cst_102 : f32 to vector<2x32xf32>
    %157 = arith.addf %156, %155 : vector<2x32xf32>
    %158 = arith.divf %156, %157 : vector<2x32xf32>
    %159 = arith.mulf %152, %146 : vector<2x32xf32>
    %160 = arith.addf %122, %159 : vector<2x32xf32>
    %161 = math.tanh %160 : vector<2x32xf32>
    %cst_103 = arith.constant 1.000000e+00 : f32
    %162 = vector.broadcast %cst_103 : f32 to vector<2x32xf32>
    %163 = arith.subf %162, %158 : vector<2x32xf32>
    %164 = arith.mulf %163, %161 : vector<2x32xf32>
    %165 = arith.mulf %158, %98 : vector<2x32xf32>
    %166 = arith.addf %164, %165 : vector<2x32xf32>
    %167 = vector.broadcast %0 : i32 to vector<2x1xi32>
    %168 = arith.cmpi sgt, %4, %167 : vector<2x1xi32>
    %169 = vector.shape_cast %168 : vector<2x1xi1> to vector<2x1xi1>
    %170 = vector.broadcast %169 : vector<2x1xi1> to vector<2x32xi1>
    %171 = arith.select %170, %166, %98 : vector<2x32xi1>, vector<2x32xf32>
    %c0_104 = arith.constant 0 : index
    %c0_105 = arith.constant 0 : index
    %172 = vector.load %arg15[%c0_104, %c0_105] : memref<2x32xf32, #tpu.memory_space<vmem>>, vector<2x32xf32>
    tpu.vector_store %arg15[%c0_104, %c0_105], %171 {strides = array<i32>} : memref<2x32xf32, #tpu.memory_space<vmem>>, vector<2x32xf32>,
    %173 = arith.index_cast %0 : i32 to index
    %c0_106 = arith.constant 0 : index
    %c0_107 = arith.constant 0 : index
    %174 = vector.load %arg12[%173, %c0_106, %c0_107] : memref<8x2x32xf32, #tpu.memory_space<vmem>>, vector<1x2x32xf32>
    %175 = vector.shape_cast %174 : vector<1x2x32xf32> to vector<2x32xf32>
    %cst_108 = arith.constant 0.000000e+00 : f32
    %176 = vector.shape_cast %168 : vector<2x1xi1> to vector<2x1xi1>
    %177 = vector.broadcast %176 : vector<2x1xi1> to vector<2x32xi1>
    %178 = vector.broadcast %cst_108 : f32 to vector<2x32xf32>
    %179 = arith.select %177, %166, %178 : vector<2x32xi1>, vector<2x32xf32>
    %180 = arith.addf %175, %179 : vector<2x32xf32>
    %181 = arith.index_cast %0 : i32 to index
    %c0_109 = arith.constant 0 : index
    %c0_110 = arith.constant 0 : index
    %182 = vector.load %arg12[%181, %c0_109, %c0_110] : memref<8x2x32xf32, #tpu.memory_space<vmem>>, vector<1x2x32xf32>
    %183 = vector.shape_cast %182 : vector<1x2x32xf32> to vector<2x32xf32>
    %184 = vector.shape_cast %180 : vector<2x32xf32> to vector<1x2x32xf32>
    tpu.vector_store %arg12[%181, %c0_109, %c0_110], %184 {strides = array<i32>} : memref<8x2x32xf32, #tpu.memory_space<vmem>>, vector<1x2x32xf32>,
    %c7_i32_111 = arith.constant 7 : i32
    %185 = arith.cmpi eq, %arg0, %c7_i32_111 : i32
    %186 = arith.extui %185 : i1 to i32
    %c0_i32_112 = arith.constant 0 : i32
    %187 = arith.cmpi ne, %186, %c0_i32_112 : i32
    scf.if %187 {
      %c0_113 = arith.constant 0 : index
      %c0_114 = arith.constant 0 : index
      %188 = vector.load %arg14[%c0_113, %c0_114] : memref<2x32xf32, #tpu.memory_space<vmem>>, vector<2x32xf32>
      %c0_115 = arith.constant 0 : index
      %c0_116 = arith.constant 0 : index
      %189 = vector.load %arg15[%c0_115, %c0_116] : memref<2x32xf32, #tpu.memory_space<vmem>>, vector<2x32xf32>
      %190 = arith.addf %188, %189 : vector<2x32xf32>
      %c0_117 = arith.constant 0 : index
      %c0_118 = arith.constant 0 : index
      %191 = vector.load %arg13[%c0_117, %c0_118] : memref<2x32xf32, #tpu.memory_space<vmem>>, vector<2x32xf32>
      tpu.vector_store %arg13[%c0_117, %c0_118], %190 {strides = array<i32>} : memref<2x32xf32, #tpu.memory_space<vmem>>, vector<2x32xf32>,
    } else {
    }
    return
  }
  func.func @transform_0(%arg0: i32) -> (i32, i32, i32) {
    %c0_i32 = arith.constant 0 : i32
    %c0_i32_0 = arith.constant 0 : i32
    %c0_i32_1 = arith.constant 0 : i32
    %c0_i32_2 = arith.constant 0 : i32
    return %c0_i32, %c0_i32_0, %c0_i32_1 : i32, i32, i32
  }
  func.func @transform_1(%arg0: i32) -> (i32, i32) {
    %c0_i32 = arith.constant 0 : i32
    %c0_i32_0 = arith.constant 0 : i32
    %c0_i32_1 = arith.constant 0 : i32
    return %c0_i32, %c0_i32_0 : i32, i32
  }
  func.func @transform_2(%arg0: i32) -> (i32, i32, i32) {
    %c0_i32 = arith.constant 0 : i32
    %c0_i32_0 = arith.constant 0 : i32
    %c0_i32_1 = arith.constant 0 : i32
    %c0_i32_2 = arith.constant 0 : i32
    return %c0_i32, %c0_i32_0, %c0_i32_1 : i32, i32, i32
  }
  func.func @transform_3(%arg0: i32) -> (i32, i32, i32) {
    %c0_i32 = arith.constant 0 : i32
    %c0_i32_0 = arith.constant 0 : i32
    %c0_i32_1 = arith.constant 0 : i32
    %c0_i32_2 = arith.constant 0 : i32
    return %c0_i32, %c0_i32_0, %c0_i32_1 : i32, i32, i32
  }
  func.func @transform_4(%arg0: i32) -> (i32, i32, i32) {
    %c0_i32 = arith.constant 0 : i32
    %c0_i32_0 = arith.constant 0 : i32
    %c0_i32_1 = arith.constant 0 : i32
    %c0_i32_2 = arith.constant 0 : i32
    return %c0_i32, %c0_i32_0, %c0_i32_1 : i32, i32, i32
  }
  func.func @transform_5(%arg0: i32) -> (i32, i32, i32) {
    %c0_i32 = arith.constant 0 : i32
    %c0_i32_0 = arith.constant 0 : i32
    %c0_i32_1 = arith.constant 0 : i32
    %c0_i32_2 = arith.constant 0 : i32
    return %c0_i32, %c0_i32_0, %c0_i32_1 : i32, i32, i32
  }
  func.func @transform_6(%arg0: i32) -> (i32, i32, i32) {
    %c0_i32 = arith.constant 0 : i32
    %c0_i32_0 = arith.constant 0 : i32
    %c0_i32_1 = arith.constant 0 : i32
    %c0_i32_2 = arith.constant 0 : i32
    return %c0_i32, %c0_i32_0, %c0_i32_1 : i32, i32, i32
  }
  func.func @transform_7(%arg0: i32) -> (i32, i32, i32) {
    %c0_i32 = arith.constant 0 : i32
    %c0_i32_0 = arith.constant 0 : i32
    %c0_i32_1 = arith.constant 0 : i32
    %c0_i32_2 = arith.constant 0 : i32
    return %c0_i32, %c0_i32_0, %c0_i32_1 : i32, i32, i32
  }
  func.func @transform_8(%arg0: i32) -> (i32, i32, i32) {
    %c0_i32 = arith.constant 0 : i32
    %c0_i32_0 = arith.constant 0 : i32
    %c0_i32_1 = arith.constant 0 : i32
    %c0_i32_2 = arith.constant 0 : i32
    return %c0_i32, %c0_i32_0, %c0_i32_1 : i32, i32, i32
  }
  func.func @transform_9(%arg0: i32) -> (i32, i32, i32) {
    %c0_i32 = arith.constant 0 : i32
    %c0_i32_0 = arith.constant 0 : i32
    %c0_i32_1 = arith.constant 0 : i32
    %c0_i32_2 = arith.constant 0 : i32
    return %c0_i32, %c0_i32_0, %c0_i32_1 : i32, i32, i32
  }
  func.func @transform_10(%arg0: i32) -> (i32, i32, i32) {
    %c0_i32 = arith.constant 0 : i32
    %c0_i32_0 = arith.constant 0 : i32
    %c0_i32_1 = arith.constant 0 : i32
    %c0_i32_2 = arith.constant 0 : i32
    return %c0_i32, %c0_i32_0, %c0_i32_1 : i32, i32, i32
  }
  func.func @transform_11(%arg0: i32) -> (i32, i32, i32) {
    %c0_i32 = arith.constant 0 : i32
    %c0_i32_0 = arith.constant 0 : i32
    %c0_i32_1 = arith.constant 0 : i32
    %c0_i32_2 = arith.constant 0 : i32
    return %c0_i32, %c0_i32_0, %c0_i32_1 : i32, i32, i32
  }
  func.func @transform_12(%arg0: i32) -> (i32, i32) {
    %c0_i32 = arith.constant 0 : i32
    %c0_i32_0 = arith.constant 0 : i32
    %c0_i32_1 = arith.constant 0 : i32
    return %c0_i32, %c0_i32_0 : i32, i32
  }
}

</mosaic_0001>

<llo_original>
// kernel: _encoder_forward_impl.1
$region0: #{_encoder_forward_impl.1}
  #allocation0 [shape = 'u32[]', space=smem, size = 0x4, offset = 0x4, fixed_abs, tag = 'smem constant byte address 0x4 - core index']
  #allocation1 [shape = 'u32[144,128]{1,0:T(1,128)}', space=vmem, size = 0x12000, scoped, tag = 'internal scratch']
  #allocation2 [shape = 'f32[2,32]{1,0:T(2,128)}', space=vmem, size = 0x400, scoped, tag = 'scratch operand']
  #allocation3 [shape = 'f32[2,32]{1,0:T(2,128)}', space=vmem, size = 0x400, scoped, tag = 'scratch operand']
  %s0 = inlined_call_operand.vmem [shape: f32[8,2,32], index: 0, kind: input, shape index: {}]
  %s1 = inlined_call_operand.vmem [shape: s32[2,1], index: 1, kind: input, shape index: {}]
  %s2 = inlined_call_operand.vmem [shape: f32[2,2,32], index: 2, kind: input, shape index: {}]
  %s3 = inlined_call_operand.vmem [shape: bf16[3,32,32], index: 3, kind: input, shape index: {}]
  %s4 = inlined_call_operand.vmem [shape: bf16[3,32,32], index: 4, kind: input, shape index: {}]
  %s5 = inlined_call_operand.vmem [shape: f32[3,1,32], index: 5, kind: input, shape index: {}]
  %s6 = inlined_call_operand.vmem [shape: f32[3,1,32], index: 6, kind: input, shape index: {}]
  %s7 = inlined_call_operand.vmem [shape: bf16[3,32,32], index: 7, kind: input, shape index: {}]
  %s8 = inlined_call_operand.vmem [shape: bf16[3,32,32], index: 8, kind: input, shape index: {}]
  %s9 = inlined_call_operand.vmem [shape: f32[3,1,32], index: 9, kind: input, shape index: {}]
  %s10 = inlined_call_operand.vmem [shape: f32[3,1,32], index: 10, kind: input, shape index: {}]
  %s11 = inlined_call_operand.hbm [shape: f32[8,2,32], index: 11, kind: output, shape index: {0}]
  %s12 = inlined_call_operand.hbm [shape: f32[2,32], index: 12, kind: output, shape index: {1}]
  %13 = xla_tuple %s11, %s12
  %s14 = sld [smem:[#allocation0]]
  $region93: #{_encoder_forward_impl.1} parent=0
    _
  %s16 = ssub.s32 1, %s14
  %s17 = scalar_select 0, %s16, %s14
  $region1: #{_encoder_forward_impl.1} parent=0
    #allocation4 [shape = 'u8[8192]{0}', space=vmem, size = 0x2000, scoped, tag = 'output window, operand 0, single buffered']
    #allocation5 [shape = 's32[2]{0}', space=sflag, size = 0x8, scoped, tag = 'scoped memory for _encoder_forward_impl.1']
    #allocation6 [shape = 'u8[1024]{0}', space=vmem, size = 0x400, scoped, tag = 'output window, operand 1, single buffered']
    #allocation7 [shape = 's32[1]{0}', space=sflag, size = 0x4, scoped, tag = 'scoped memory for _encoder_forward_impl.1']
    %18 = vsyncpa [#allocation5], 0
    %19 = vsyncpa [#allocation7], 0
    loop: start=0, step=1, limit=10
    $region2: #{_encoder_forward_impl.1} parent=1 // loop_pre_header
      _
    $region3: #{_encoder_forward_impl.1} parent=1 // loop_header
      %s21 = sphi 0, %s25
      %p22 = scmp.ge.s32.totalorder %s21, 10
      %s29 = sphi 0, %s29
      %s31 = sphi 0, %s29
      %s32 = sphi 0, %s31
      %s46 = sphi 0, %s32
      %s50 = sphi 0, %s50
      %s52 = sphi 0, %s50
      %s53 = sphi 0, %s52
      %s67 = sphi 0, %s53
      %s71 = sphi 0, %s71
      %s73 = sphi 0, %s71
      %s74 = sphi 0, %s73
      %s88 = sphi 0, %s74
      %s92 = sphi 0, %s92
      %s94 = sphi 0, %s92
      %s95 = sphi 0, %s94
      %s109 = sphi 0, %s95
      %s113 = sphi 0, %s113
      %s115 = sphi 0, %s113
      %s116 = sphi 0, %s115
      %s130 = sphi 0, %s116
      %s134 = sphi 0, %s134
      %s136 = sphi 0, %s134
      %s137 = sphi 0, %s136
      %s151 = sphi 0, %s137
      %s155 = sphi 0, %s155
      %s157 = sphi 0, %s155
      %s158 = sphi 0, %s157
      %s172 = sphi 0, %s158
      %s176 = sphi 0, %s176
      %s178 = sphi 0, %s176
      %s179 = sphi 0, %s178
      %s193 = sphi 0, %s179
      %s197 = sphi 0, %s197
      %s199 = sphi 0, %s197
      %s200 = sphi 0, %s199
      %s214 = sphi 0, %s200
      %s218 = sphi 0, %s218
      %s220 = sphi 0, %s218
      %s221 = sphi 0, %s220
      %s235 = sphi 0, %s221
      %s239 = sphi 0, %s239
      %s241 = sphi 0, %s239
      %s242 = sphi 0, %s241
      %s256 = sphi 0, %s242
      %s260 = sphi 0, %s260
      %s262 = sphi 0, %s260
      %s263 = sphi 0, %s262
      %s277 = sphi 0, %s263
      %s281 = sphi 0, %s281
      %s283 = sphi 0, %s281
      %s284 = sphi 0, %s283
      %s298 = sphi 0, %s284
    $region4: #{_encoder_forward_impl.1} parent=1 // loop_header_branch
      %24 = sbr.rel (%p22) target = $region8
    $region5: #{_encoder_forward_impl.1} parent=1 // loop_body
      %s26 = ssub.s32 %s21, 1
      %s27 = ssub.s32 %s21, 2
      %s28 = sadd.s32 %s21, 1
      %s30 = sadd.s32 %s29, 1
      %p33 = scmp.eq.s32.totalorder %s21, 7
      %p34 = scmp.ne.s32.totalorder %s29, %s31
      %p35 = scmp.eq.s32.totalorder %s21, 0
      %p36 = por %p34, %p35
      %p37 = scmp.ne.s32.totalorder %s29, %s31
      %p38 = scmp.eq.s32.totalorder %s26, 7
      %p39 = por %p37, %p38
      %p40 = scmp.ne.s32.totalorder %s31, %s32
      %p41 = scmp.eq.s32.totalorder %s26, 0
      %p42 = por %p40, %p41
      %p43 = scmp.ne.s32.totalorder %s31, %s32
      %p44 = scmp.eq.s32.totalorder %s27, 7
      %p45 = por %p43, %p44
      %p47 = scmp.ne.s32.totalorder %s32, %s46
      %p48 = scmp.eq.s32.totalorder %s27, 0
      %p49 = por %p47, %p48
      %s51 = sadd.s32 %s50, 1
      %p54 = scmp.eq.s32.totalorder %s21, 7
      %p55 = scmp.ne.s32.totalorder %s50, %s52
      %p56 = scmp.eq.s32.totalorder %s21, 0
      %p57 = por %p55, %p56
      %p58 = scmp.ne.s32.totalorder %s50, %s52
      %p59 = scmp.eq.s32.totalorder %s26, 7
      %p60 = por %p58, %p59
      %p61 = scmp.ne.s32.totalorder %s52, %s53
      %p62 = scmp.eq.s32.totalorder %s26, 0
      %p63 = por %p61, %p62
      %p64 = scmp.ne.s32.totalorder %s52, %s53
      %p65 = scmp.eq.s32.totalorder %s27, 7
      %p66 = por %p64, %p65
      %p68 = scmp.ne.s32.totalorder %s53, %s67
      %p69 = scmp.eq.s32.totalorder %s27, 0
      %p70 = por %p68, %p69
      %s72 = sadd.s32 %s71, 1
      %p75 = scmp.eq.s32.totalorder %s21, 7
      %p76 = scmp.ne.s32.totalorder %s71, %s73
      %p77 = scmp.eq.s32.totalorder %s21, 0
      %p78 = por %p76, %p77
      %p79 = scmp.ne.s32.totalorder %s71, %s73
      %p80 = scmp.eq.s32.totalorder %s26, 7
      %p81 = por %p79, %p80
      %p82 = scmp.ne.s32.totalorder %s73, %s74
      %p83 = scmp.eq.s32.totalorder %s26, 0
      %p84 = por %p82, %p83
      %p85 = scmp.ne.s32.totalorder %s73, %s74
      %p86 = scmp.eq.s32.totalorder %s27, 7
      %p87 = por %p85, %p86
      %p89 = scmp.ne.s32.totalorder %s74, %s88
      %p90 = scmp.eq.s32.totalorder %s27, 0
      %p91 = por %p89, %p90
      %s93 = sadd.s32 %s92, 1
      %p96 = scmp.eq.s32.totalorder %s21, 7
      %p97 = scmp.ne.s32.totalorder %s92, %s94
      %p98 = scmp.eq.s32.totalorder %s21, 0
      %p99 = por %p97, %p98
      %p100 = scmp.ne.s32.totalorder %s92, %s94
      %p101 = scmp.eq.s32.totalorder %s26, 7
      %p102 = por %p100, %p101
      %p103 = scmp.ne.s32.totalorder %s94, %s95
      %p104 = scmp.eq.s32.totalorder %s26, 0
      %p105 = por %p103, %p104
      %p106 = scmp.ne.s32.totalorder %s94, %s95
      %p107 = scmp.eq.s32.totalorder %s27, 7
      %p108 = por %p106, %p107
      %p110 = scmp.ne.s32.totalorder %s95, %s109
      %p111 = scmp.eq.s32.totalorder %s27, 0
      %p112 = por %p110, %p111
      %s114 = sadd.s32 %s113, 1
      %p117 = scmp.eq.s32.totalorder %s21, 7
      %p118 = scmp.ne.s32.totalorder %s113, %s115
      %p119 = scmp.eq.s32.totalorder %s21, 0
      %p120 = por %p118, %p119
      %p121 = scmp.ne.s32.totalorder %s113, %s115
      %p122 = scmp.eq.s32.totalorder %s26, 7
      %p123 = por %p121, %p122
      %p124 = scmp.ne.s32.totalorder %s115, %s116
      %p125 = scmp.eq.s32.totalorder %s26, 0
      %p126 = por %p124, %p125
      %p127 = scmp.ne.s32.totalorder %s115, %s116
      %p128 = scmp.eq.s32.totalorder %s27, 7
      %p129 = por %p127, %p128
      %p131 = scmp.ne.s32.totalorder %s116, %s130
      %p132 = scmp.eq.s32.totalorder %s27, 0
      %p133 = por %p131, %p132
      %s135 = sadd.s32 %s134, 1
      %p138 = scmp.eq.s32.totalorder %s21, 7
      %p139 = scmp.ne.s32.totalorder %s134, %s136
      %p140 = scmp.eq.s32.totalorder %s21, 0
      %p141 = por %p139, %p140
      %p142 = scmp.ne.s32.totalorder %s134, %s136
      %p143 = scmp.eq.s32.totalorder %s26, 7
      %p144 = por %p142, %p143
      %p145 = scmp.ne.s32.totalorder %s136, %s137
      %p146 = scmp.eq.s32.totalorder %s26, 0
      %p147 = por %p145, %p146
      %p148 = scmp.ne.s32.totalorder %s136, %s137
      %p149 = scmp.eq.s32.totalorder %s27, 7
      %p150 = por %p148, %p149
      %p152 = scmp.ne.s32.totalorder %s137, %s151
      %p153 = scmp.eq.s32.totalorder %s27, 0
      %p154 = por %p152, %p153
      %s156 = sadd.s32 %s155, 1
      %p159 = scmp.eq.s32.totalorder %s21, 7
      %p160 = scmp.ne.s32.totalorder %s155, %s157
      %p161 = scmp.eq.s32.totalorder %s21, 0
      %p162 = por %p160, %p161
      %p163 = scmp.ne.s32.totalorder %s155, %s157
      %p164 = scmp.eq.s32.totalorder %s26, 7
      %p165 = por %p163, %p164
      %p166 = scmp.ne.s32.totalorder %s157, %s158
      %p167 = scmp.eq.s32.totalorder %s26, 0
      %p168 = por %p166, %p167
      %p169 = scmp.ne.s32.totalorder %s157, %s158
      %p170 = scmp.eq.s32.totalorder %s27, 7
      %p171 = por %p169, %p170
      %p173 = scmp.ne.s32.totalorder %s158, %s172
      %p174 = scmp.eq.s32.totalorder %s27, 0
      %p175 = por %p173, %p174
      %s177 = sadd.s32 %s176, 1
      %p180 = scmp.eq.s32.totalorder %s21, 7
      %p181 = scmp.ne.s32.totalorder %s176, %s178
      %p182 = scmp.eq.s32.totalorder %s21, 0
      %p183 = por %p181, %p182
      %p184 = scmp.ne.s32.totalorder %s176, %s178
      %p185 = scmp.eq.s32.totalorder %s26, 7
      %p186 = por %p184, %p185
      %p187 = scmp.ne.s32.totalorder %s178, %s179
      %p188 = scmp.eq.s32.totalorder %s26, 0
      %p189 = por %p187, %p188
      %p190 = scmp.ne.s32.totalorder %s178, %s179
      %p191 = scmp.eq.s32.totalorder %s27, 7
      %p192 = por %p190, %p191
      %p194 = scmp.ne.s32.totalorder %s179, %s193
      %p195 = scmp.eq.s32.totalorder %s27, 0
      %p196 = por %p194, %p195
      %s198 = sadd.s32 %s197, 1
      %p201 = scmp.eq.s32.totalorder %s21, 7
      %p202 = scmp.ne.s32.totalorder %s197, %s199
      %p203 = scmp.eq.s32.totalorder %s21, 0
      %p204 = por %p202, %p203
      %p205 = scmp.ne.s32.totalorder %s197, %s199
      %p206 = scmp.eq.s32.totalorder %s26, 7
      %p207 = por %p205, %p206
      %p208 = scmp.ne.s32.totalorder %s199, %s200
      %p209 = scmp.eq.s32.totalorder %s26, 0
      %p210 = por %p208, %p209
      %p211 = scmp.ne.s32.totalorder %s199, %s200
      %p212 = scmp.eq.s32.totalorder %s27, 7
      %p213 = por %p211, %p212
      %p215 = scmp.ne.s32.totalorder %s200, %s214
      %p216 = scmp.eq.s32.totalorder %s27, 0
      %p217 = por %p215, %p216
      %s219 = sadd.s32 %s218, 1
      %p222 = scmp.eq.s32.totalorder %s21, 7
      %p223 = scmp.ne.s32.totalorder %s218, %s220
      %p224 = scmp.eq.s32.totalorder %s21, 0
      %p225 = por %p223, %p224
      %p226 = scmp.ne.s32.totalorder %s218, %s220
      %p227 = scmp.eq.s32.totalorder %s26, 7
      %p228 = por %p226, %p227
      %p229 = scmp.ne.s32.totalorder %s220, %s221
      %p230 = scmp.eq.s32.totalorder %s26, 0
      %p231 = por %p229, %p230
      %p232 = scmp.ne.s32.totalorder %s220, %s221
      %p233 = scmp.eq.s32.totalorder %s27, 7
      %p234 = por %p232, %p233
      %p236 = scmp.ne.s32.totalorder %s221, %s235
      %p237 = scmp.eq.s32.totalorder %s27, 0
      %p238 = por %p236, %p237
      %s240 = sadd.s32 %s239, 1
      %p243 = scmp.eq.s32.totalorder %s21, 7
      %p244 = scmp.ne.s32.totalorder %s239, %s241
      %p245 = scmp.eq.s32.totalorder %s21, 0
      %p246 = por %p244, %p245
      %p247 = scmp.ne.s32.totalorder %s239, %s241
      %p248 = scmp.eq.s32.totalorder %s26, 7
      %p249 = por %p247, %p248
      %p250 = scmp.ne.s32.totalorder %s241, %s242
      %p251 = scmp.eq.s32.totalorder %s26, 0
      %p252 = por %p250, %p251
      %p253 = scmp.ne.s32.totalorder %s241, %s242
      %p254 = scmp.eq.s32.totalorder %s27, 7
      %p255 = por %p253, %p254
      %p257 = scmp.ne.s32.totalorder %s242, %s256
      %p258 = scmp.eq.s32.totalorder %s27, 0
      %p259 = por %p257, %p258
      %s261 = sadd.s32 %s260, 1
      %p264 = scmp.eq.s32.totalorder %s21, 7
      %p265 = scmp.ne.s32.totalorder %s260, %s262
      %p266 = scmp.eq.s32.totalorder %s21, 0
      %p267 = por %p265, %p266
      %p268 = scmp.ne.s32.totalorder %s260, %s262
      %p269 = scmp.eq.s32.totalorder %s26, 7
      %p270 = por %p268, %p269
      %p271 = scmp.ne.s32.totalorder %s262, %s263
      %p272 = scmp.eq.s32.totalorder %s26, 0
      %p273 = por %p271, %p272
      %p274 = scmp.ne.s32.totalorder %s262, %s263
      %p275 = scmp.eq.s32.totalorder %s27, 7
      %p276 = por %p274, %p275
      %p278 = scmp.ne.s32.totalorder %s263, %s277
      %p279 = scmp.eq.s32.totalorder %s27, 0
      %p280 = por %p278, %p279
      %s282 = sadd.s32 %s281, 1
      %p285 = scmp.eq.s32.totalorder %s21, 7
      %p286 = scmp.ne.s32.totalorder %s281, %s283
      %p287 = scmp.eq.s32.totalorder %s21, 0
      %p288 = por %p286, %p287
      %p289 = scmp.ne.s32.totalorder %s281, %s283
      %p290 = scmp.eq.s32.totalorder %s26, 7
      %p291 = por %p289, %p290
      %p292 = scmp.ne.s32.totalorder %s283, %s284
      %p293 = scmp.eq.s32.totalorder %s26, 0
      %p294 = por %p292, %p293
      %p295 = scmp.ne.s32.totalorder %s283, %s284
      %p296 = scmp.eq.s32.totalorder %s27, 7
      %p297 = por %p295, %p296
      %p299 = scmp.ne.s32.totalorder %s284, %s298
      %p300 = scmp.eq.s32.totalorder %s27, 0
      %p301 = por %p299, %p300
      %p302 = scmp.le.s32.totalorder 1, %s21
      %p303 = scmp.lt.s32.totalorder %s21, 9
      %p304 = pnand %p302, %p303
      %p305 = pneg %p304
      // Predicated region
      $region9: #{_encoder_forward_impl.1} parent=5 // pred_check
        _
      $region10: #{_encoder_forward_impl.1} parent=5 // pred_check_branch
        %307 = sbr.rel (%p304) target = $region12
      $region11: #{_encoder_forward_impl.1} parent=5 // pred_region
        %s308 = ssub.s32 %s21, 1
        // Predicated region
        $region13: #{_encoder_forward_impl.1} parent=11 // pred_check
          %p309 = pneg %p42
        $region14: #{_encoder_forward_impl.1} parent=11 // pred_check_branch
          %311 = sbr.rel (%p309) target = $region16
        $region15: #{_encoder_forward_impl.1} parent=11 // pred_region
          _
        $region16: #{_encoder_forward_impl.1} parent=11 // pred_fallthru
          _
        // Predicated region
        $region17: #{_encoder_forward_impl.1} parent=11 // pred_check
          %p312 = pneg %p63
        $region18: #{_encoder_forward_impl.1} parent=11 // pred_check_branch
          %314 = sbr.rel (%p312) target = $region20
        $region19: #{_encoder_forward_impl.1} parent=11 // pred_region
          _
        $region20: #{_encoder_forward_impl.1} parent=11 // pred_fallthru
          _
        // Predicated region
        $region21: #{_encoder_forward_impl.1} parent=11 // pred_check
          %p315 = pneg %p84
        $region22: #{_encoder_forward_impl.1} parent=11 // pred_check_branch
          %317 = sbr.rel (%p315) target = $region24
        $region23: #{_encoder_forward_impl.1} parent=11 // pred_region
          _
        $region24: #{_encoder_forward_impl.1} parent=11 // pred_fallthru
          _
        // Predicated region
        $region25: #{_encoder_forward_impl.1} parent=11 // pred_check
          %p318 = pneg %p105
        $region26: #{_encoder_forward_impl.1} parent=11 // pred_check_branch
          %320 = sbr.rel (%p318) target = $region28
        $region27: #{_encoder_forward_impl.1} parent=11 // pred_region
          _
        $region28: #{_encoder_forward_impl.1} parent=11 // pred_fallthru
          _
        // Predicated region
        $region29: #{_encoder_forward_impl.1} parent=11 // pred_check
          %p321 = pneg %p126
        $region30: #{_encoder_forward_impl.1} parent=11 // pred_check_branch
          %323 = sbr.rel (%p321) target = $region32
        $region31: #{_encoder_forward_impl.1} parent=11 // pred_region
          _
        $region32: #{_encoder_forward_impl.1} parent=11 // pred_fallthru
          _
        // Predicated region
        $region33: #{_encoder_forward_impl.1} parent=11 // pred_check
          %p324 = pneg %p147
        $region34: #{_encoder_forward_impl.1} parent=11 // pred_check_branch
          %326 = sbr.rel (%p324) target = $region36
        $region35: #{_encoder_forward_impl.1} parent=11 // pred_region
          _
        $region36: #{_encoder_forward_impl.1} parent=11 // pred_fallthru
          _
        // Predicated region
        $region37: #{_encoder_forward_impl.1} parent=11 // pred_check
          %p327 = pneg %p168
        $region38: #{_encoder_forward_impl.1} parent=11 // pred_check_branch
          %329 = sbr.rel (%p327) target = $region40
        $region39: #{_encoder_forward_impl.1} parent=11 // pred_region
          _
        $region40: #{_encoder_forward_impl.1} parent=11 // pred_fallthru
          _
        // Predicated region
        $region41: #{_encoder_forward_impl.1} parent=11 // pred_check
          %p330 = pneg %p189
        $region42: #{_encoder_forward_impl.1} parent=11 // pred_check_branch
          %332 = sbr.rel (%p330) target = $region44
        $region43: #{_encoder_forward_impl.1} parent=11 // pred_region
          _
        $region44: #{_encoder_forward_impl.1} parent=11 // pred_fallthru
          _
        // Predicated region
        $region45: #{_encoder_forward_impl.1} parent=11 // pred_check
          %p333 = pneg %p210
        $region46: #{_encoder_forward_impl.1} parent=11 // pred_check_branch
          %335 = sbr.rel (%p333) target = $region48
        $region47: #{_encoder_forward_impl.1} parent=11 // pred_region
          _
        $region48: #{_encoder_forward_impl.1} parent=11 // pred_fallthru
          _
        // Predicated region
        $region49: #{_encoder_forward_impl.1} parent=11 // pred_check
          %p336 = pneg %p231
        $region50: #{_encoder_forward_impl.1} parent=11 // pred_check_branch
          %338 = sbr.rel (%p336) target = $region52
        $region51: #{_encoder_forward_impl.1} parent=11 // pred_region
          _
        $region52: #{_encoder_forward_impl.1} parent=11 // pred_fallthru
          _
        // Predicated region
        $region53: #{_encoder_forward_impl.1} parent=11 // pred_check
          %p339 = pneg %p252
        $region54: #{_encoder_forward_impl.1} parent=11 // pred_check_branch
          %341 = sbr.rel (%p339) target = $region56
        $region55: #{_encoder_forward_impl.1} parent=11 // pred_region
          _
        $region56: #{_encoder_forward_impl.1} parent=11 // pred_fallthru
          _
      $region12: #{_encoder_forward_impl.1} parent=5 // pred_fallthru
        _
      %p342 = scmp.lt.s32.totalorder %s21, 8
      // Predicated region
      $region57: #{_encoder_forward_impl.1} parent=5 // pred_check
        %p343 = pneg %p342
      $region58: #{_encoder_forward_impl.1} parent=5 // pred_check_branch
        %345 = sbr.rel (%p343) target = $region60
      $region59: #{_encoder_forward_impl.1} parent=5 // pred_region
        _
      $region60: #{_encoder_forward_impl.1} parent=5 // pred_fallthru
        _
      %p346 = scmp.le.s32.totalorder 1, %s21
      %p347 = scmp.lt.s32.totalorder %s21, 9
      %p348 = pnand %p346, %p347
      %p349 = pneg %p348
      // Predicated region
      $region61: #{_encoder_forward_impl.1} parent=5 // pred_check
        _
      $region62: #{_encoder_forward_impl.1} parent=5 // pred_check_branch
        %351 = sbr.rel (%p348) target = $region64
      $region63: #{_encoder_forward_impl.1} parent=5 // pred_region
        %s352 = ssub.s32 %s21, 1
        %p353 = pneg %p42
        %p354 = pneg %p39
        %p355 = pneg %p63
        %p356 = pneg %p60
        %p357 = pneg %p84
        %p358 = pneg %p81
        %p359 = pneg %p105
        %p360 = pneg %p102
        %p361 = pneg %p126
        %p362 = pneg %p123
        %p363 = pneg %p147
        %p364 = pneg %p144
        %p365 = pneg %p168
        %p366 = pneg %p165
        %p367 = pneg %p189
        %p368 = pneg %p186
        %p369 = pneg %p210
        %p370 = pneg %p207
        %p371 = pneg %p231
        %p372 = pneg %p228
        %p373 = pneg %p252
        %p374 = pneg %p249
        %p375 = pneg %p273
        %p376 = pneg %p270
        %p377 = pneg %p294
        %p378 = pneg %p291
        %s380 = ssub.s32 7, %s26
        %p381 = scmp.eq.s32.totalorder %s26, 0
        // Predicated region
        $region65: #{_encoder_forward_impl.1} parent=63 // pred_check
          %p382 = pneg %p381
        $region66: #{_encoder_forward_impl.1} parent=63 // pred_check_branch
          %384 = sbr.rel (%p382) target = $region68
        $region67: #{_encoder_forward_impl.1} parent=63 // pred_region
          %vm385 = vcmask 254976
          %386 = vst.msk [vmem:[#allocation4] sm:$0x3] %vm385, 0.0
          %387 = vst.msk [vmem:[#allocation4 + $0x2] sm:$0x3] %vm385, 0.0
          %388 = vst.msk [vmem:[#allocation4 + $0x4] sm:$0x3] %vm385, 0.0
          %389 = vst.msk [vmem:[#allocation4 + $0x6] sm:$0x3] %vm385, 0.0
          %390 = vst.msk [vmem:[#allocation4 + $0x8] sm:$0x3] %vm385, 0.0
          %391 = vst.msk [vmem:[#allocation4 + $0xa] sm:$0x3] %vm385, 0.0
          %392 = vst.msk [vmem:[#allocation4 + $0xc] sm:$0x3] %vm385, 0.0
          %393 = vst.msk [vmem:[#allocation4 + $0xe] sm:$0x3] %vm385, 0.0
          %v394 = vld [vmem:[%s2] sm:$0x3]
          %395 = vst.msk [vmem:[#allocation2] sm:$0x3] %vm385, %v394
          %s396 = scalar_lea.vmem %s2, 2
          %v397 = vld [vmem:[%s396] sm:$0x3]
          %398 = vst.msk [vmem:[#allocation3] sm:$0x3] %vm385, %v397
        $region68: #{_encoder_forward_impl.1} parent=63 // pred_fallthru
          _
        %v399 = vld [vmem:[%s1] sm:$0x3]
        %s400 = smul.u32 %s26, 2
        %s401 = scalar_lea.vmem %s0, %s400
        %v402 = vld [vmem:[%s401] sm:$0x3]
        %v403 = vld [vmem:[#allocation2] sm:$0x3]
        %v404 = vld [vmem:[%s3] sm:$0xf]
        %v405 = vld [vmem:[%s3 + $0x4] sm:$0xf]
        %v406 = vld [vmem:[%s3 + $0x8] sm:$0xf]
        %v407 = vld [vmem:[%s3 + $0xc] sm:$0xf]
        %v408 = vpack.c.bf16 %v402, %v402
        %v409 = vld [vmem:[%s5] sm:$0x1]
        %v411 = vlaneseq
        %v412 = vshrl.u32 %v411, 7
        %v413 = vsub.s32 0, %v412
        %v414 = vrot.slane %v409, %v413
        %v420 = vunpack.c.l.b16 %v404
        %v421 = vunpack.c.l.b16 %v405
        %v422 = vunpack.c.l.b16 %v406
        %v423 = vunpack.c.l.b16 %v407
        %v424 = vpack.c.b16 %v421, %v420
        %v425 = vpack.c.b16 %v423, %v422
        %vm428 = vcmask 261120
        %v430 = vsel %vm428, %v408, 0
        %432 = vmatprep.subr.bf16.mxu0 0
        %433 = vmatpush1.bf16.msra.mxu0 %v424
        %434 = vmatprep.subr.bf16.mxu0 0
        %435 = vmatpush1.bf16.msra.mxu0 %v425
        %436 = vmatprep.subr.bf16.mxu0 0
        %437 = vmatpush1.bf16.msra.mxu0 0
        %438 = vmatprep.subr.bf16.mxu0 0
        %439 = vmatpush1.bf16.msra.mxu0 0
        %440 = vmatprep.subr.bf16.mxu0 0
        %441 = vmatpush1.bf16.msra.mxu0 0
        %442 = vmatprep.subr.bf16.mxu0 0
        %443 = vmatpush1.bf16.msra.mxu0 0
        %444 = vmatprep.subr.bf16.mxu0 0
        %445 = vmatpush1.bf16.msra.mxu0 0
        %446 = vmatprep.subr.bf16.mxu0 0
        %447 = vmatpush1.bf16.msra.mxu0 0
        %448 = vmatprep.subr.bf16.mxu0 0
        %449 = vmatpush1.bf16.msra.mxu0 0
        %450 = vmatprep.subr.bf16.mxu0 0
        %451 = vmatpush1.bf16.msra.mxu0 0
        %452 = vmatprep.subr.bf16.mxu0 0
        %453 = vmatpush1.bf16.msra.mxu0 0
        %454 = vmatprep.subr.bf16.mxu0 0
        %455 = vmatpush1.bf16.msra.mxu0 0
        %456 = vmatprep.subr.bf16.mxu0 0
        %457 = vmatpush1.bf16.msra.mxu0 0
        %458 = vmatprep.subr.bf16.mxu0 0
        %459 = vmatpush1.bf16.msra.mxu0 0
        %460 = vmatprep.subr.bf16.mxu0 0
        %461 = vmatpush1.bf16.msra.mxu0 0
        %462 = vmatprep.subr.bf16.mxu0 0
        %463 = vmatpush1.bf16.msra.mxu0 0
        %464 = vmatprep.mubr.bf16.mxu0 0
        %465 = vmatmul.mubr.bf16.gmra.mrb[0].mxu0 %v430
        %v466 = vpop.f32.mrb[0].mxu0
        %v467 = vadd.f32 %v414, %v466
        %v468 = vpop.f32.mrb[0].mxu0
        %v469 = vpop.f32.mrb[0].mxu0
        %v470 = vpop.f32.mrb[0].mxu0
        %471 = vdwg.mxu0
        %s472 = scalar_lea.vmem %s3, 16
        %v473 = vld [vmem:[%s472] sm:$0xf]
        %v474 = vld [vmem:[%s472 + $0x4] sm:$0xf]
        %v475 = vld [vmem:[%s472 + $0x8] sm:$0xf]
        %v476 = vld [vmem:[%s472 + $0xc] sm:$0xf]
        %s477 = scalar_lea.vmem %s5, 1
        %v478 = vld [vmem:[%s477] sm:$0x1]
        %v480 = vlaneseq
        %v481 = vshrl.u32 %v480, 7
        %v482 = vsub.s32 0, %v481
        %v483 = vrot.slane %v478, %v482
        %v489 = vunpack.c.l.b16 %v473
        %v490 = vunpack.c.l.b16 %v474
        %v491 = vunpack.c.l.b16 %v475
        %v492 = vunpack.c.l.b16 %v476
        %v493 = vpack.c.b16 %v490, %v489
        %v494 = vpack.c.b16 %v492, %v491
        %497 = vmatprep.subr.bf16.mxu0 0
        %498 = vmatpush1.bf16.msra.mxu0 %v493
        %499 = vmatprep.subr.bf16.mxu0 0
        %500 = vmatpush1.bf16.msra.mxu0 %v494
        %501 = vmatprep.subr.bf16.mxu0 0
        %502 = vmatpush1.bf16.msra.mxu0 0
        %503 = vmatprep.subr.bf16.mxu0 0
        %504 = vmatpush1.bf16.msra.mxu0 0
        %505 = vmatprep.subr.bf16.mxu0 0
        %506 = vmatpush1.bf16.msra.mxu0 0
        %507 = vmatprep.subr.bf16.mxu0 0
        %508 = vmatpush1.bf16.msra.mxu0 0
        %509 = vmatprep.subr.bf16.mxu0 0
        %510 = vmatpush1.bf16.msra.mxu0 0
        %511 = vmatprep.subr.bf16.mxu0 0
        %512 = vmatpush1.bf16.msra.mxu0 0
        %513 = vmatprep.subr.bf16.mxu0 0
        %514 = vmatpush1.bf16.msra.mxu0 0
        %515 = vmatprep.subr.bf16.mxu0 0
        %516 = vmatpush1.bf16.msra.mxu0 0
        %517 = vmatprep.subr.bf16.mxu0 0
        %518 = vmatpush1.bf16.msra.mxu0 0
        %519 = vmatprep.subr.bf16.mxu0 0
        %520 = vmatpush1.bf16.msra.mxu0 0
        %521 = vmatprep.subr.bf16.mxu0 0
        %522 = vmatpush1.bf16.msra.mxu0 0
        %523 = vmatprep.subr.bf16.mxu0 0
        %524 = vmatpush1.bf16.msra.mxu0 0
        %525 = vmatprep.subr.bf16.mxu0 0
        %526 = vmatpush1.bf16.msra.mxu0 0
        %527 = vmatprep.subr.bf16.mxu0 0
        %528 = vmatpush1.bf16.msra.mxu0 0
        %529 = vmatprep.mubr.bf16.mxu0 0
        %530 = vmatmul.mubr.bf16.gmra.mrb[0].mxu0 %v430
        %v531 = vpop.f32.mrb[0].mxu0
        %v532 = vadd.f32 %v483, %v531
        %v533 = vpop.f32.mrb[0].mxu0
        %v534 = vpop.f32.mrb[0].mxu0
        %v535 = vpop.f32.mrb[0].mxu0
        %536 = vdwg.mxu0
        %s537 = scalar_lea.vmem %s3, 32
        %v538 = vld [vmem:[%s537] sm:$0xf]
        %v539 = vld [vmem:[%s537 + $0x4] sm:$0xf]
        %v540 = vld [vmem:[%s537 + $0x8] sm:$0xf]
        %v541 = vld [vmem:[%s537 + $0xc] sm:$0xf]
        %s542 = scalar_lea.vmem %s5, 2
        %v543 = vld [vmem:[%s542] sm:$0x1]
        %v545 = vlaneseq
        %v546 = vshrl.u32 %v545, 7
        %v547 = vsub.s32 0, %v546
        %v548 = vrot.slane %v543, %v547
        %v554 = vunpack.c.l.b16 %v538
        %v555 = vunpack.c.l.b16 %v539
        %v556 = vunpack.c.l.b16 %v540
        %v557 = vunpack.c.l.b16 %v541
        %v558 = vpack.c.b16 %v555, %v554
        %v559 = vpack.c.b16 %v557, %v556
        %562 = vmatprep.subr.bf16.mxu0 0
        %563 = vmatpush1.bf16.msra.mxu0 %v558
        %564 = vmatprep.subr.bf16.mxu0 0
        %565 = vmatpush1.bf16.msra.mxu0 %v559
        %566 = vmatprep.subr.bf16.mxu0 0
        %567 = vmatpush1.bf16.msra.mxu0 0
        %568 = vmatprep.subr.bf16.mxu0 0
        %569 = vmatpush1.bf16.msra.mxu0 0
        %570 = vmatprep.subr.bf16.mxu0 0
        %571 = vmatpush1.bf16.msra.mxu0 0
        %572 = vmatprep.subr.bf16.mxu0 0
        %573 = vmatpush1.bf16.msra.mxu0 0
        %574 = vmatprep.subr.bf16.mxu0 0
        %575 = vmatpush1.bf16.msra.mxu0 0
        %576 = vmatprep.subr.bf16.mxu0 0
        %577 = vmatpush1.bf16.msra.mxu0 0
        %578 = vmatprep.subr.bf16.mxu0 0
        %579 = vmatpush1.bf16.msra.mxu0 0
        %580 = vmatprep.subr.bf16.mxu0 0
        %581 = vmatpush1.bf16.msra.mxu0 0
        %582 = vmatprep.subr.bf16.mxu0 0
        %583 = vmatpush1.bf16.msra.mxu0 0
        %584 = vmatprep.subr.bf16.mxu0 0
        %585 = vmatpush1.bf16.msra.mxu0 0
        %586 = vmatprep.subr.bf16.mxu0 0
        %587 = vmatpush1.bf16.msra.mxu0 0
        %588 = vmatprep.subr.bf16.mxu0 0
        %589 = vmatpush1.bf16.msra.mxu0 0
        %590 = vmatprep.subr.bf16.mxu0 0
        %591 = vmatpush1.bf16.msra.mxu0 0
        %592 = vmatprep.subr.bf16.mxu0 0
        %593 = vmatpush1.bf16.msra.mxu0 0
        %594 = vmatprep.mubr.bf16.mxu0 0
        %595 = vmatmul.mubr.bf16.gmra.mrb[0].mxu0 %v430
        %v596 = vpop.f32.mrb[0].mxu0
        %v597 = vadd.f32 %v548, %v596
        %v598 = vpop.f32.mrb[0].mxu0
        %v599 = vpop.f32.mrb[0].mxu0
        %v600 = vpop.f32.mrb[0].mxu0
        %601 = vdwg.mxu0
        %v602 = vld [vmem:[%s4] sm:$0xf]
        %v603 = vld [vmem:[%s4 + $0x4] sm:$0xf]
        %v604 = vld [vmem:[%s4 + $0x8] sm:$0xf]
        %v605 = vld [vmem:[%s4 + $0xc] sm:$0xf]
        %v606 = vpack.c.bf16 %v403, %v403
        %v607 = vld [vmem:[%s6] sm:$0x1]
        %v609 = vlaneseq
        %v610 = vshrl.u32 %v609, 7
        %v611 = vsub.s32 0, %v610
        %v612 = vrot.slane %v607, %v611
        %v618 = vunpack.c.l.b16 %v602
        %v619 = vunpack.c.l.b16 %v603
        %v620 = vunpack.c.l.b16 %v604
        %v621 = vunpack.c.l.b16 %v605
        %v622 = vpack.c.b16 %v619, %v618
        %v623 = vpack.c.b16 %v621, %v620
        %v627 = vsel %vm428, %v606, 0
        %629 = vmatprep.subr.bf16.mxu0 0
        %630 = vmatpush1.bf16.msra.mxu0 %v622
        %631 = vmatprep.subr.bf16.mxu0 0
        %632 = vmatpush1.bf16.msra.mxu0 %v623
        %633 = vmatprep.subr.bf16.mxu0 0
        %634 = vmatpush1.bf16.msra.mxu0 0
        %635 = vmatprep.subr.bf16.mxu0 0
        %636 = vmatpush1.bf16.msra.mxu0 0
        %637 = vmatprep.subr.bf16.mxu0 0
        %638 = vmatpush1.bf16.msra.mxu0 0
        %639 = vmatprep.subr.bf16.mxu0 0
        %640 = vmatpush1.bf16.msra.mxu0 0
        %641 = vmatprep.subr.bf16.mxu0 0
        %642 = vmatpush1.bf16.msra.mxu0 0
        %643 = vmatprep.subr.bf16.mxu0 0
        %644 = vmatpush1.bf16.msra.mxu0 0
        %645 = vmatprep.subr.bf16.mxu0 0
        %646 = vmatpush1.bf16.msra.mxu0 0
        %647 = vmatprep.subr.bf16.mxu0 0
        %648 = vmatpush1.bf16.msra.mxu0 0
        %649 = vmatprep.subr.bf16.mxu0 0
        %650 = vmatpush1.bf16.msra.mxu0 0
        %651 = vmatprep.subr.bf16.mxu0 0
        %652 = vmatpush1.bf16.msra.mxu0 0
        %653 = vmatprep.subr.bf16.mxu0 0
        %654 = vmatpush1.bf16.msra.mxu0 0
        %655 = vmatprep.subr.bf16.mxu0 0
        %656 = vmatpush1.bf16.msra.mxu0 0
        %657 = vmatprep.subr.bf16.mxu0 0
        %658 = vmatpush1.bf16.msra.mxu0 0
        %659 = vmatprep.subr.bf16.mxu0 0
        %660 = vmatpush1.bf16.msra.mxu0 0
        %661 = vmatprep.mubr.bf16.mxu0 0
        %662 = vmatmul.mubr.bf16.gmra.mrb[0].mxu0 %v627
        %v663 = vpop.f32.mrb[0].mxu0
        %v664 = vadd.f32 %v612, %v663
        %v665 = vpop.f32.mrb[0].mxu0
        %v666 = vpop.f32.mrb[0].mxu0
        %v667 = vpop.f32.mrb[0].mxu0
        %668 = vdwg.mxu0
        %s669 = scalar_lea.vmem %s4, 16
        %v670 = vld [vmem:[%s669] sm:$0xf]
        %v671 = vld [vmem:[%s669 + $0x4] sm:$0xf]
        %v672 = vld [vmem:[%s669 + $0x8] sm:$0xf]
        %v673 = vld [vmem:[%s669 + $0xc] sm:$0xf]
        %s674 = scalar_lea.vmem %s6, 1
        %v675 = vld [vmem:[%s674] sm:$0x1]
        %v677 = vlaneseq
        %v678 = vshrl.u32 %v677, 7
        %v679 = vsub.s32 0, %v678
        %v680 = vrot.slane %v675, %v679
        %v686 = vunpack.c.l.b16 %v670
        %v687 = vunpack.c.l.b16 %v671
        %v688 = vunpack.c.l.b16 %v672
        %v689 = vunpack.c.l.b16 %v673
        %v690 = vpack.c.b16 %v687, %v686
        %v691 = vpack.c.b16 %v689, %v688
        %694 = vmatprep.subr.bf16.mxu0 0
        %695 = vmatpush1.bf16.msra.mxu0 %v690
        %696 = vmatprep.subr.bf16.mxu0 0
        %697 = vmatpush1.bf16.msra.mxu0 %v691
        %698 = vmatprep.subr.bf16.mxu0 0
        %699 = vmatpush1.bf16.msra.mxu0 0
        %700 = vmatprep.subr.bf16.mxu0 0
        %701 = vmatpush1.bf16.msra.mxu0 0
        %702 = vmatprep.subr.bf16.mxu0 0
        %703 = vmatpush1.bf16.msra.mxu0 0
        %704 = vmatprep.subr.bf16.mxu0 0
        %705 = vmatpush1.bf16.msra.mxu0 0
        %706 = vmatprep.subr.bf16.mxu0 0
        %707 = vmatpush1.bf16.msra.mxu0 0
        %708 = vmatprep.subr.bf16.mxu0 0
        %709 = vmatpush1.bf16.msra.mxu0 0
        %710 = vmatprep.subr.bf16.mxu0 0
        %711 = vmatpush1.bf16.msra.mxu0 0
        %712 = vmatprep.subr.bf16.mxu0 0
        %713 = vmatpush1.bf16.msra.mxu0 0
        %714 = vmatprep.subr.bf16.mxu0 0
        %715 = vmatpush1.bf16.msra.mxu0 0
        %716 = vmatprep.subr.bf16.mxu0 0
        %717 = vmatpush1.bf16.msra.mxu0 0
        %718 = vmatprep.subr.bf16.mxu0 0
        %719 = vmatpush1.bf16.msra.mxu0 0
        %720 = vmatprep.subr.bf16.mxu0 0
        %721 = vmatpush1.bf16.msra.mxu0 0
        %722 = vmatprep.subr.bf16.mxu0 0
        %723 = vmatpush1.bf16.msra.mxu0 0
        %724 = vmatprep.subr.bf16.mxu0 0
        %725 = vmatpush1.bf16.msra.mxu0 0
        %726 = vmatprep.mubr.bf16.mxu0 0
        %727 = vmatmul.mubr.bf16.gmra.mrb[0].mxu0 %v627
        %v728 = vpop.f32.mrb[0].mxu0
        %v729 = vadd.f32 %v680, %v728
        %v730 = vpop.f32.mrb[0].mxu0
        %v731 = vpop.f32.mrb[0].mxu0
        %v732 = vpop.f32.mrb[0].mxu0
        %733 = vdwg.mxu0
        %s734 = scalar_lea.vmem %s4, 32
        %v735 = vld [vmem:[%s734] sm:$0xf]
        %v736 = vld [vmem:[%s734 + $0x4] sm:$0xf]
        %v737 = vld [vmem:[%s734 + $0x8] sm:$0xf]
        %v738 = vld [vmem:[%s734 + $0xc] sm:$0xf]
        %s739 = scalar_lea.vmem %s6, 2
        %v740 = vld [vmem:[%s739] sm:$0x1]
        %v742 = vlaneseq
        %v743 = vshrl.u32 %v742, 7
        %v744 = vsub.s32 0, %v743
        %v745 = vrot.slane %v740, %v744
        %v751 = vunpack.c.l.b16 %v735
        %v752 = vunpack.c.l.b16 %v736
        %v753 = vunpack.c.l.b16 %v737
        %v754 = vunpack.c.l.b16 %v738
        %v755 = vpack.c.b16 %v752, %v751
        %v756 = vpack.c.b16 %v754, %v753
        %759 = vmatprep.subr.bf16.mxu0 0
        %760 = vmatpush1.bf16.msra.mxu0 %v755
        %761 = vmatprep.subr.bf16.mxu0 0
        %762 = vmatpush1.bf16.msra.mxu0 %v756
        %763 = vmatprep.subr.bf16.mxu0 0
        %764 = vmatpush1.bf16.msra.mxu0 0
        %765 = vmatprep.subr.bf16.mxu0 0
        %766 = vmatpush1.bf16.msra.mxu0 0
        %767 = vmatprep.subr.bf16.mxu0 0
        %768 = vmatpush1.bf16.msra.mxu0 0
        %769 = vmatprep.subr.bf16.mxu0 0
        %770 = vmatpush1.bf16.msra.mxu0 0
        %771 = vmatprep.subr.bf16.mxu0 0
        %772 = vmatpush1.bf16.msra.mxu0 0
        %773 = vmatprep.subr.bf16.mxu0 0
        %774 = vmatpush1.bf16.msra.mxu0 0
        %775 = vmatprep.subr.bf16.mxu0 0
        %776 = vmatpush1.bf16.msra.mxu0 0
        %777 = vmatprep.subr.bf16.mxu0 0
        %778 = vmatpush1.bf16.msra.mxu0 0
        %779 = vmatprep.subr.bf16.mxu0 0
        %780 = vmatpush1.bf16.msra.mxu0 0
        %781 = vmatprep.subr.bf16.mxu0 0
        %782 = vmatpush1.bf16.msra.mxu0 0
        %783 = vmatprep.subr.bf16.mxu0 0
        %784 = vmatpush1.bf16.msra.mxu0 0
        %785 = vmatprep.subr.bf16.mxu0 0
        %786 = vmatpush1.bf16.msra.mxu0 0
        %787 = vmatprep.subr.bf16.mxu0 0
        %788 = vmatpush1.bf16.msra.mxu0 0
        %789 = vmatprep.subr.bf16.mxu0 0
        %790 = vmatpush1.bf16.msra.mxu0 0
        %791 = vmatprep.mubr.bf16.mxu0 0
        %792 = vmatmul.mubr.bf16.gmra.mrb[0].mxu0 %v627
        %v793 = vpop.f32.mrb[0].mxu0
        %v794 = vadd.f32 %v745, %v793
        %v795 = vpop.f32.mrb[0].mxu0
        %v796 = vpop.f32.mrb[0].mxu0
        %v797 = vpop.f32.mrb[0].mxu0
        %798 = vdwg.mxu0
        %v799 = vadd.f32 %v467, %v664
        %v800 = vxor.u32 %v799, 2147483648
        %v801 = vmul.f32 %v800, 1.442695
        %v802 = vpow.pop %v801
        %v803 = vadd.f32 %v802, 1.0
        %v804 = vrcp.pop %v803
        %v805 = vmul.f32 1.0, %v804
        %v806 = vadd.f32 %v532, %v729
        %v807 = vxor.u32 %v806, 2147483648
        %v808 = vmul.f32 %v807, 1.442695
        %v809 = vpow.pop %v808
        %v810 = vadd.f32 %v809, 1.0
        %v811 = vrcp.pop %v810
        %v812 = vmul.f32 1.0, %v811
        %v813 = vmul.f32 %v805, %v794
        %v814 = vadd.f32 %v597, %v813
        %v815 = vtanh.pop %v814
        %v816 = vsub.f32 1.0, %v812
        %v817 = vmul.f32 %v816, %v815
        %v818 = vmul.f32 %v812, %v403
        %v819 = vadd.f32 %v817, %v818
        %v820 = vstv %s26
        %vm821 = vcmp.gt.s32.totalorder %v399, %v820
        %v822 = vsel %vm821, 1, 0
        %823 = vset.pattern.permute.xlu0 0
        %824 = vperm.xlu0 %823, %v822
        %v825 = vpop.permute.xlu0 %824
        %vm826 = vcmp.eq.s32.totalorder %v825, 1
        %v827 = vsel %vm826, %v819, %v403
        %vm828 = vcmask 254976
        %829 = vst.msk [vmem:[#allocation2] sm:$0x3] %vm828, %v827
        %s830 = scalar_lea.vmem [#allocation4], %s400
        %v831 = vld [vmem:[%s830] sm:$0x3]
        %v832 = vsel %vm826, %v819, 0.0
        %v833 = vadd.f32 %v831, %v832
        %834 = vst.msk [vmem:[%s830] sm:$0x3] %vm828, %v833
        %s835 = smul.u32 %s380, 2
        %s836 = scalar_lea.vmem %s0, %s835
        %v837 = vld [vmem:[%s836] sm:$0x3]
        %v838 = vld [vmem:[#allocation3] sm:$0x3]
        %v839 = vld [vmem:[%s7] sm:$0xf]
        %v840 = vld [vmem:[%s7 + $0x4] sm:$0xf]
        %v841 = vld [vmem:[%s7 + $0x8] sm:$0xf]
        %v842 = vld [vmem:[%s7 + $0xc] sm:$0xf]
        %v843 = vpack.c.bf16 %v837, %v837
        %v844 = vld [vmem:[%s9] sm:$0x1]
        %v846 = vlaneseq
        %v847 = vshrl.u32 %v846, 7
        %v848 = vsub.s32 0, %v847
        %v849 = vrot.slane %v844, %v848
        %v855 = vunpack.c.l.b16 %v839
        %v856 = vunpack.c.l.b16 %v840
        %v857 = vunpack.c.l.b16 %v841
        %v858 = vunpack.c.l.b16 %v842
        %v859 = vpack.c.b16 %v856, %v855
        %v860 = vpack.c.b16 %v858, %v857
        %v864 = vsel %vm428, %v843, 0
        %866 = vmatprep.subr.bf16.mxu0 0
        %867 = vmatpush1.bf16.msra.mxu0 %v859
        %868 = vmatprep.subr.bf16.mxu0 0
        %869 = vmatpush1.bf16.msra.mxu0 %v860
        %870 = vmatprep.subr.bf16.mxu0 0
        %871 = vmatpush1.bf16.msra.mxu0 0
        %872 = vmatprep.subr.bf16.mxu0 0
        %873 = vmatpush1.bf16.msra.mxu0 0
        %874 = vmatprep.subr.bf16.mxu0 0
        %875 = vmatpush1.bf16.msra.mxu0 0
        %876 = vmatprep.subr.bf16.mxu0 0
        %877 = vmatpush1.bf16.msra.mxu0 0
        %878 = vmatprep.subr.bf16.mxu0 0
        %879 = vmatpush1.bf16.msra.mxu0 0
        %880 = vmatprep.subr.bf16.mxu0 0
        %881 = vmatpush1.bf16.msra.mxu0 0
        %882 = vmatprep.subr.bf16.mxu0 0
        %883 = vmatpush1.bf16.msra.mxu0 0
        %884 = vmatprep.subr.bf16.mxu0 0
        %885 = vmatpush1.bf16.msra.mxu0 0
        %886 = vmatprep.subr.bf16.mxu0 0
        %887 = vmatpush1.bf16.msra.mxu0 0
        %888 = vmatprep.subr.bf16.mxu0 0
        %889 = vmatpush1.bf16.msra.mxu0 0
        %890 = vmatprep.subr.bf16.mxu0 0
        %891 = vmatpush1.bf16.msra.mxu0 0
        %892 = vmatprep.subr.bf16.mxu0 0
        %893 = vmatpush1.bf16.msra.mxu0 0
        %894 = vmatprep.subr.bf16.mxu0 0
        %895 = vmatpush1.bf16.msra.mxu0 0
        %896 = vmatprep.subr.bf16.mxu0 0
        %897 = vmatpush1.bf16.msra.mxu0 0
        %898 = vmatprep.mubr.bf16.mxu0 0
        %899 = vmatmul.mubr.bf16.gmra.mrb[0].mxu0 %v864
        %v900 = vpop.f32.mrb[0].mxu0
        %v901 = vadd.f32 %v849, %v900
        %v902 = vpop.f32.mrb[0].mxu0
        %v903 = vpop.f32.mrb[0].mxu0
        %v904 = vpop.f32.mrb[0].mxu0
        %905 = vdwg.mxu0
        %s906 = scalar_lea.vmem %s7, 16
        %v907 = vld [vmem:[%s906] sm:$0xf]
        %v908 = vld [vmem:[%s906 + $0x4] sm:$0xf]
        %v909 = vld [vmem:[%s906 + $0x8] sm:$0xf]
        %v910 = vld [vmem:[%s906 + $0xc] sm:$0xf]
        %s911 = scalar_lea.vmem %s9, 1
        %v912 = vld [vmem:[%s911] sm:$0x1]
        %v914 = vlaneseq
        %v915 = vshrl.u32 %v914, 7
        %v916 = vsub.s32 0, %v915
        %v917 = vrot.slane %v912, %v916
        %v923 = vunpack.c.l.b16 %v907
        %v924 = vunpack.c.l.b16 %v908
        %v925 = vunpack.c.l.b16 %v909
        %v926 = vunpack.c.l.b16 %v910
        %v927 = vpack.c.b16 %v924, %v923
        %v928 = vpack.c.b16 %v926, %v925
        %931 = vmatprep.subr.bf16.mxu0 0
        %932 = vmatpush1.bf16.msra.mxu0 %v927
        %933 = vmatprep.subr.bf16.mxu0 0
        %934 = vmatpush1.bf16.msra.mxu0 %v928
        %935 = vmatprep.subr.bf16.mxu0 0
        %936 = vmatpush1.bf16.msra.mxu0 0
        %937 = vmatprep.subr.bf16.mxu0 0
        %938 = vmatpush1.bf16.msra.mxu0 0
        %939 = vmatprep.subr.bf16.mxu0 0
        %940 = vmatpush1.bf16.msra.mxu0 0
        %941 = vmatprep.subr.bf16.mxu0 0
        %942 = vmatpush1.bf16.msra.mxu0 0
        %943 = vmatprep.subr.bf16.mxu0 0
        %944 = vmatpush1.bf16.msra.mxu0 0
        %945 = vmatprep.subr.bf16.mxu0 0
        %946 = vmatpush1.bf16.msra.mxu0 0
        %947 = vmatprep.subr.bf16.mxu0 0
        %948 = vmatpush1.bf16.msra.mxu0 0
        %949 = vmatprep.subr.bf16.mxu0 0
        %950 = vmatpush1.bf16.msra.mxu0 0
        %951 = vmatprep.subr.bf16.mxu0 0
        %952 = vmatpush1.bf16.msra.mxu0 0
        %953 = vmatprep.subr.bf16.mxu0 0
        %954 = vmatpush1.bf16.msra.mxu0 0
        %955 = vmatprep.subr.bf16.mxu0 0
        %956 = vmatpush1.bf16.msra.mxu0 0
        %957 = vmatprep.subr.bf16.mxu0 0
        %958 = vmatpush1.bf16.msra.mxu0 0
        %959 = vmatprep.subr.bf16.mxu0 0
        %960 = vmatpush1.bf16.msra.mxu0 0
        %961 = vmatprep.subr.bf16.mxu0 0
        %962 = vmatpush1.bf16.msra.mxu0 0
        %963 = vmatprep.mubr.bf16.mxu0 0
        %964 = vmatmul.mubr.bf16.gmra.mrb[0].mxu0 %v864
        %v965 = vpop.f32.mrb[0].mxu0
        %v966 = vadd.f32 %v917, %v965
        %v967 = vpop.f32.mrb[0].mxu0
        %v968 = vpop.f32.mrb[0].mxu0
        %v969 = vpop.f32.mrb[0].mxu0
        %970 = vdwg.mxu0
        %s971 = scalar_lea.vmem %s7, 32
        %v972 = vld [vmem:[%s971] sm:$0xf]
        %v973 = vld [vmem:[%s971 + $0x4] sm:$0xf]
        %v974 = vld [vmem:[%s971 + $0x8] sm:$0xf]
        %v975 = vld [vmem:[%s971 + $0xc] sm:$0xf]
        %s976 = scalar_lea.vmem %s9, 2
        %v977 = vld [vmem:[%s976] sm:$0x1]
        %v979 = vlaneseq
        %v980 = vshrl.u32 %v979, 7
        %v981 = vsub.s32 0, %v980
        %v982 = vrot.slane %v977, %v981
        %v988 = vunpack.c.l.b16 %v972
        %v989 = vunpack.c.l.b16 %v973
        %v990 = vunpack.c.l.b16 %v974
        %v991 = vunpack.c.l.b16 %v975
        %v992 = vpack.c.b16 %v989, %v988
        %v993 = vpack.c.b16 %v991, %v990
        %996 = vmatprep.subr.bf16.mxu0 0
        %997 = vmatpush1.bf16.msra.mxu0 %v992
        %998 = vmatprep.subr.bf16.mxu0 0
        %999 = vmatpush1.bf16.msra.mxu0 %v993
        %1000 = vmatprep.subr.bf16.mxu0 0
        %1001 = vmatpush1.bf16.msra.mxu0 0
        %1002 = vmatprep.subr.bf16.mxu0 0
        %1003 = vmatpush1.bf16.msra.mxu0 0
        %1004 = vmatprep.subr.bf16.mxu0 0
        %1005 = vmatpush1.bf16.msra.mxu0 0
        %1006 = vmatprep.subr.bf16.mxu0 0
        %1007 = vmatpush1.bf16.msra.mxu0 0
        %1008 = vmatprep.subr.bf16.mxu0 0
        %1009 = vmatpush1.bf16.msra.mxu0 0
        %1010 = vmatprep.subr.bf16.mxu0 0
        %1011 = vmatpush1.bf16.msra.mxu0 0
        %1012 = vmatprep.subr.bf16.mxu0 0
        %1013 = vmatpush1.bf16.msra.mxu0 0
        %1014 = vmatprep.subr.bf16.mxu0 0
        %1015 = vmatpush1.bf16.msra.mxu0 0
        %1016 = vmatprep.subr.bf16.mxu0 0
        %1017 = vmatpush1.bf16.msra.mxu0 0
        %1018 = vmatprep.subr.bf16.mxu0 0
        %1019 = vmatpush1.bf16.msra.mxu0 0
        %1020 = vmatprep.subr.bf16.mxu0 0
        %1021 = vmatpush1.bf16.msra.mxu0 0
        %1022 = vmatprep.subr.bf16.mxu0 0
        %1023 = vmatpush1.bf16.msra.mxu0 0
        %1024 = vmatprep.subr.bf16.mxu0 0
        %1025 = vmatpush1.bf16.msra.mxu0 0
        %1026 = vmatprep.subr.bf16.mxu0 0
        %1027 = vmatpush1.bf16.msra.mxu0 0
        %1028 = vmatprep.mubr.bf16.mxu0 0
        %1029 = vmatmul.mubr.bf16.gmra.mrb[0].mxu0 %v864
        %v1030 = vpop.f32.mrb[0].mxu0
        %v1031 = vadd.f32 %v982, %v1030
        %v1032 = vpop.f32.mrb[0].mxu0
        %v1033 = vpop.f32.mrb[0].mxu0
        %v1034 = vpop.f32.mrb[0].mxu0
        %1035 = vdwg.mxu0
        %v1036 = vld [vmem:[%s8] sm:$0xf]
        %v1037 = vld [vmem:[%s8 + $0x4] sm:$0xf]
        %v1038 = vld [vmem:[%s8 + $0x8] sm:$0xf]
        %v1039 = vld [vmem:[%s8 + $0xc] sm:$0xf]
        %v1040 = vpack.c.bf16 %v838, %v838
        %v1041 = vld [vmem:[%s10] sm:$0x1]
        %v1043 = vlaneseq
        %v1044 = vshrl.u32 %v1043, 7
        %v1045 = vsub.s32 0, %v1044
        %v1046 = vrot.slane %v1041, %v1045
        %v1052 = vunpack.c.l.b16 %v1036
        %v1053 = vunpack.c.l.b16 %v1037
        %v1054 = vunpack.c.l.b16 %v1038
        %v1055 = vunpack.c.l.b16 %v1039
        %v1056 = vpack.c.b16 %v1053, %v1052
        %v1057 = vpack.c.b16 %v1055, %v1054
        %v1061 = vsel %vm428, %v1040, 0
        %1063 = vmatprep.subr.bf16.mxu0 0
        %1064 = vmatpush1.bf16.msra.mxu0 %v1056
        %1065 = vmatprep.subr.bf16.mxu0 0
        %1066 = vmatpush1.bf16.msra.mxu0 %v1057
        %1067 = vmatprep.subr.bf16.mxu0 0
        %1068 = vmatpush1.bf16.msra.mxu0 0
        %1069 = vmatprep.subr.bf16.mxu0 0
        %1070 = vmatpush1.bf16.msra.mxu0 0
        %1071 = vmatprep.subr.bf16.mxu0 0
        %1072 = vmatpush1.bf16.msra.mxu0 0
        %1073 = vmatprep.subr.bf16.mxu0 0
        %1074 = vmatpush1.bf16.msra.mxu0 0
        %1075 = vmatprep.subr.bf16.mxu0 0
        %1076 = vmatpush1.bf16.msra.mxu0 0
        %1077 = vmatprep.subr.bf16.mxu0 0
        %1078 = vmatpush1.bf16.msra.mxu0 0
        %1079 = vmatprep.subr.bf16.mxu0 0
        %1080 = vmatpush1.bf16.msra.mxu0 0
        %1081 = vmatprep.subr.bf16.mxu0 0
        %1082 = vmatpush1.bf16.msra.mxu0 0
        %1083 = vmatprep.subr.bf16.mxu0 0
        %1084 = vmatpush1.bf16.msra.mxu0 0
        %1085 = vmatprep.subr.bf16.mxu0 0
        %1086 = vmatpush1.bf16.msra.mxu0 0
        %1087 = vmatprep.subr.bf16.mxu0 0
        %1088 = vmatpush1.bf16.msra.mxu0 0
        %1089 = vmatprep.subr.bf16.mxu0 0
        %1090 = vmatpush1.bf16.msra.mxu0 0
        %1091 = vmatprep.subr.bf16.mxu0 0
        %1092 = vmatpush1.bf16.msra.mxu0 0
        %1093 = vmatprep.subr.bf16.mxu0 0
        %1094 = vmatpush1.bf16.msra.mxu0 0
        %1095 = vmatprep.mubr.bf16.mxu0 0
        %1096 = vmatmul.mubr.bf16.gmra.mrb[0].mxu0 %v1061
        %v1097 = vpop.f32.mrb[0].mxu0
        %v1098 = vadd.f32 %v1046, %v1097
        %v1099 = vpop.f32.mrb[0].mxu0
        %v1100 = vpop.f32.mrb[0].mxu0
        %v1101 = vpop.f32.mrb[0].mxu0
        %1102 = vdwg.mxu0
        %s1103 = scalar_lea.vmem %s8, 16
        %v1104 = vld [vmem:[%s1103] sm:$0xf]
        %v1105 = vld [vmem:[%s1103 + $0x4] sm:$0xf]
        %v1106 = vld [vmem:[%s1103 + $0x8] sm:$0xf]
        %v1107 = vld [vmem:[%s1103 + $0xc] sm:$0xf]
        %s1108 = scalar_lea.vmem %s10, 1
        %v1109 = vld [vmem:[%s1108] sm:$0x1]
        %v1111 = vlaneseq
        %v1112 = vshrl.u32 %v1111, 7
        %v1113 = vsub.s32 0, %v1112
        %v1114 = vrot.slane %v1109, %v1113
        %v1120 = vunpack.c.l.b16 %v1104
        %v1121 = vunpack.c.l.b16 %v1105
        %v1122 = vunpack.c.l.b16 %v1106
        %v1123 = vunpack.c.l.b16 %v1107
        %v1124 = vpack.c.b16 %v1121, %v1120
        %v1125 = vpack.c.b16 %v1123, %v1122
        %1128 = vmatprep.subr.bf16.mxu0 0
        %1129 = vmatpush1.bf16.msra.mxu0 %v1124
        %1130 = vmatprep.subr.bf16.mxu0 0
        %1131 = vmatpush1.bf16.msra.mxu0 %v1125
        %1132 = vmatprep.subr.bf16.mxu0 0
        %1133 = vmatpush1.bf16.msra.mxu0 0
        %1134 = vmatprep.subr.bf16.mxu0 0
        %1135 = vmatpush1.bf16.msra.mxu0 0
        %1136 = vmatprep.subr.bf16.mxu0 0
        %1137 = vmatpush1.bf16.msra.mxu0 0
        %1138 = vmatprep.subr.bf16.mxu0 0
        %1139 = vmatpush1.bf16.msra.mxu0 0
        %1140 = vmatprep.subr.bf16.mxu0 0
        %1141 = vmatpush1.bf16.msra.mxu0 0
        %1142 = vmatprep.subr.bf16.mxu0 0
        %1143 = vmatpush1.bf16.msra.mxu0 0
        %1144 = vmatprep.subr.bf16.mxu0 0
        %1145 = vmatpush1.bf16.msra.mxu0 0
        %1146 = vmatprep.subr.bf16.mxu0 0
        %1147 = vmatpush1.bf16.msra.mxu0 0
        %1148 = vmatprep.subr.bf16.mxu0 0
        %1149 = vmatpush1.bf16.msra.mxu0 0
        %1150 = vmatprep.subr.bf16.mxu0 0
        %1151 = vmatpush1.bf16.msra.mxu0 0
        %1152 = vmatprep.subr.bf16.mxu0 0
        %1153 = vmatpush1.bf16.msra.mxu0 0
        %1154 = vmatprep.subr.bf16.mxu0 0
        %1155 = vmatpush1.bf16.msra.mxu0 0
        %1156 = vmatprep.subr.bf16.mxu0 0
        %1157 = vmatpush1.bf16.msra.mxu0 0
        %1158 = vmatprep.subr.bf16.mxu0 0
        %1159 = vmatpush1.bf16.msra.mxu0 0
        %1160 = vmatprep.mubr.bf16.mxu0 0
        %1161 = vmatmul.mubr.bf16.gmra.mrb[0].mxu0 %v1061
        %v1162 = vpop.f32.mrb[0].mxu0
        %v1163 = vadd.f32 %v1114, %v1162
        %v1164 = vpop.f32.mrb[0].mxu0
        %v1165 = vpop.f32.mrb[0].mxu0
        %v1166 = vpop.f32.mrb[0].mxu0
        %1167 = vdwg.mxu0
        %s1168 = scalar_lea.vmem %s8, 32
        %v1169 = vld [vmem:[%s1168] sm:$0xf]
        %v1170 = vld [vmem:[%s1168 + $0x4] sm:$0xf]
        %v1171 = vld [vmem:[%s1168 + $0x8] sm:$0xf]
        %v1172 = vld [vmem:[%s1168 + $0xc] sm:$0xf]
        %s1173 = scalar_lea.vmem %s10, 2
        %v1174 = vld [vmem:[%s1173] sm:$0x1]
        %v1176 = vlaneseq
        %v1177 = vshrl.u32 %v1176, 7
        %v1178 = vsub.s32 0, %v1177
        %v1179 = vrot.slane %v1174, %v1178
        %v1185 = vunpack.c.l.b16 %v1169
        %v1186 = vunpack.c.l.b16 %v1170
        %v1187 = vunpack.c.l.b16 %v1171
        %v1188 = vunpack.c.l.b16 %v1172
        %v1189 = vpack.c.b16 %v1186, %v1185
        %v1190 = vpack.c.b16 %v1188, %v1187
        %1193 = vmatprep.subr.bf16.mxu0 0
        %1194 = vmatpush1.bf16.msra.mxu0 %v1189
        %1195 = vmatprep.subr.bf16.mxu0 0
        %1196 = vmatpush1.bf16.msra.mxu0 %v1190
        %1197 = vmatprep.subr.bf16.mxu0 0
        %1198 = vmatpush1.bf16.msra.mxu0 0
        %1199 = vmatprep.subr.bf16.mxu0 0
        %1200 = vmatpush1.bf16.msra.mxu0 0
        %1201 = vmatprep.subr.bf16.mxu0 0
        %1202 = vmatpush1.bf16.msra.mxu0 0
        %1203 = vmatprep.subr.bf16.mxu0 0
        %1204 = vmatpush1.bf16.msra.mxu0 0
        %1205 = vmatprep.subr.bf16.mxu0 0
        %1206 = vmatpush1.bf16.msra.mxu0 0
        %1207 = vmatprep.subr.bf16.mxu0 0
        %1208 = vmatpush1.bf16.msra.mxu0 0
        %1209 = vmatprep.subr.bf16.mxu0 0
        %1210 = vmatpush1.bf16.msra.mxu0 0
        %1211 = vmatprep.subr.bf16.mxu0 0
        %1212 = vmatpush1.bf16.msra.mxu0 0
        %1213 = vmatprep.subr.bf16.mxu0 0
        %1214 = vmatpush1.bf16.msra.mxu0 0
        %1215 = vmatprep.subr.bf16.mxu0 0
        %1216 = vmatpush1.bf16.msra.mxu0 0
        %1217 = vmatprep.subr.bf16.mxu0 0
        %1218 = vmatpush1.bf16.msra.mxu0 0
        %1219 = vmatprep.subr.bf16.mxu0 0
        %1220 = vmatpush1.bf16.msra.mxu0 0
        %1221 = vmatprep.subr.bf16.mxu0 0
        %1222 = vmatpush1.bf16.msra.mxu0 0
        %1223 = vmatprep.subr.bf16.mxu0 0
        %1224 = vmatpush1.bf16.msra.mxu0 0
        %1225 = vmatprep.mubr.bf16.mxu0 0
        %1226 = vmatmul.mubr.bf16.gmra.mrb[0].mxu0 %v1061
        %v1227 = vpop.f32.mrb[0].mxu0
        %v1228 = vadd.f32 %v1179, %v1227
        %v1229 = vpop.f32.mrb[0].mxu0
        %v1230 = vpop.f32.mrb[0].mxu0
        %v1231 = vpop.f32.mrb[0].mxu0
        %1232 = vdwg.mxu0
        %v1233 = vadd.f32 %v901, %v1098
        %v1234 = vxor.u32 %v1233, 2147483648
        %v1235 = vmul.f32 %v1234, 1.442695
        %v1236 = vpow.pop %v1235
        %v1237 = vadd.f32 %v1236, 1.0
        %v1238 = vrcp.pop %v1237
        %v1239 = vmul.f32 1.0, %v1238
        %v1240 = vadd.f32 %v966, %v1163
        %v1241 = vxor.u32 %v1240, 2147483648
        %v1242 = vmul.f32 %v1241, 1.442695
        %v1243 = vpow.pop %v1242
        %v1244 = vadd.f32 %v1243, 1.0
        %v1245 = vrcp.pop %v1244
        %v1246 = vmul.f32 1.0, %v1245
        %v1247 = vmul.f32 %v1239, %v1228
        %v1248 = vadd.f32 %v1031, %v1247
        %v1249 = vtanh.pop %v1248
        %v1250 = vsub.f32 1.0, %v1246
        %v1251 = vmul.f32 %v1250, %v1249
        %v1252 = vmul.f32 %v1246, %v838
        %v1253 = vadd.f32 %v1251, %v1252
        %v1254 = vstv %s380
        %vm1255 = vcmp.gt.s32.totalorder %v399, %v1254
        %v1256 = vsel %vm1255, 1, 0
        %1257 = vset.pattern.permute.xlu0 0
        %1258 = vperm.xlu0 %1257, %v1256
        %v1259 = vpop.permute.xlu0 %1258
        %vm1260 = vcmp.eq.s32.totalorder %v1259, 1
        %v1261 = vsel %vm1260, %v1253, %v838
        %1262 = vst.msk [vmem:[#allocation3] sm:$0x3] %vm828, %v1261
        %s1263 = scalar_lea.vmem [#allocation4], %s835
        %v1264 = vld [vmem:[%s1263] sm:$0x3]
        %v1265 = vsel %vm1260, %v1253, 0.0
        %v1266 = vadd.f32 %v1264, %v1265
        %1267 = vst.msk [vmem:[%s1263] sm:$0x3] %vm828, %v1266
        %p1268 = scmp.eq.s32.totalorder %s26, 7
        // Predicated region
        $region69: #{_encoder_forward_impl.1} parent=63 // pred_check
          %p1269 = pneg %p1268
        $region70: #{_encoder_forward_impl.1} parent=63 // pred_check_branch
          %1271 = sbr.rel (%p1269) target = $region72
        $region71: #{_encoder_forward_impl.1} parent=63 // pred_region
          %v1272 = vld [vmem:[#allocation2] sm:$0x3]
          %v1273 = vld [vmem:[#allocation3] sm:$0x3]
          %v1274 = vadd.f32 %v1272, %v1273
          %1275 = vst.msk [vmem:[#allocation6] sm:$0x3] %vm828, %v1274
        $region72: #{_encoder_forward_impl.1} parent=63 // pred_fallthru
          _
        // Predicated region
        $region73: #{_encoder_forward_impl.1} parent=63 // pred_check
          %p1276 = pneg %p270
        $region74: #{_encoder_forward_impl.1} parent=63 // pred_check_branch
          %1278 = sbr.rel (%p1276) target = $region76
        $region75: #{_encoder_forward_impl.1} parent=63 // pred_region
          %s1280 = ssub.s32 256, 256
          %1281 = vsyncadd [#allocation5], %s1280
          %s1282 = sshll.u32 [#allocation4], 4
          %s1283 = int_to_ptr.vmem [resolvable:$true] %s1282
          %1288 = dma.vmem_to_hbm [thread:$0]  %s1283, 256, %s11, [#allocation5], 32, 32, 2
        $region76: #{_encoder_forward_impl.1} parent=63 // pred_fallthru
          _
        // Predicated region
        $region77: #{_encoder_forward_impl.1} parent=63 // pred_check
          %p1289 = pneg %p291
        $region78: #{_encoder_forward_impl.1} parent=63 // pred_check_branch
          %1291 = sbr.rel (%p1289) target = $region80
        $region79: #{_encoder_forward_impl.1} parent=63 // pred_region
          %s1293 = ssub.s32 32, 32
          %1294 = vsyncadd [#allocation7], %s1293
          %s1296 = sshll.u32 [#allocation6], 4
          %s1297 = int_to_ptr.vmem [resolvable:$true] %s1296
          %1299 = dma.vmem_to_hbm [thread:$0]  %s1297, 32, %s12, [#allocation7]
        $region80: #{_encoder_forward_impl.1} parent=63 // pred_fallthru
          _
        // Predicated region
        $region81: #{_encoder_forward_impl.1} parent=63 // pred_check
          %p1300 = pneg %p270
        $region82: #{_encoder_forward_impl.1} parent=63 // pred_check_branch
          %1302 = sbr.rel (%p1300) target = $region84
        $region83: #{_encoder_forward_impl.1} parent=63 // pred_region
          %1303 = dma.done [#allocation5], 256
        $region84: #{_encoder_forward_impl.1} parent=63 // pred_fallthru
          _
        // Predicated region
        $region85: #{_encoder_forward_impl.1} parent=63 // pred_check
          %p1304 = pneg %p291
        $region86: #{_encoder_forward_impl.1} parent=63 // pred_check_branch
          %1306 = sbr.rel (%p1304) target = $region88
        $region87: #{_encoder_forward_impl.1} parent=63 // pred_region
          %1307 = dma.done [#allocation7], 32
        $region88: #{_encoder_forward_impl.1} parent=63 // pred_fallthru
          _
      $region64: #{_encoder_forward_impl.1} parent=5 // pred_fallthru
        _
      %p1308 = scmp.le.s32.totalorder 2, %s21
      // Predicated region
      $region89: #{_encoder_forward_impl.1} parent=5 // pred_check
        %p1309 = pneg %p1308
      $region90: #{_encoder_forward_impl.1} parent=5 // pred_check_branch
        %1311 = sbr.rel (%p1309) target = $region92
      $region91: #{_encoder_forward_impl.1} parent=5 // pred_region
        %s1312 = ssub.s32 %s21, 2
      $region92: #{_encoder_forward_impl.1} parent=5 // pred_fallthru
        _
    $region6: #{_encoder_forward_impl.1} parent=1 // loop_footer
      %s25 = sadd.s32 1, %s21
    $region7: #{_encoder_forward_impl.1} parent=1 // loop_footer_branch
      %20 = sbr.rel target = $region3
    $region8: #{_encoder_forward_impl.1} parent=1 // loop_exit
      _
    %1313 = vsyncpa [#allocation5], 1
    %s1314 = scalar_lea.sflag [#allocation5], 1
    %1315 = vsyncpa %s1314, 1
    %1316 = vsyncpa [#allocation7], 1

</llo_original>
